<compile_context>
chip_gen: v7x
topology: tpu7x:2x2x1
jax: 0.10.0
libtpu: 0.0.40
codegen_flags: <defaults>
</compile_context>

<pallas_src>
import jax
import jax.numpy as jnp
from jax.experimental import pallas as pl
from jax.experimental.pallas import tpu as pltpu

PAD_IDX, START_IDX, END_IDX = 0, 1, 2  # CaptionMetaMixin defaults


# ----------------------------- fused kernel --------------------------------

def _fused_caption_kernel(
    # inputs (all resident: constant block index)
    attn_ref, w_enc_ref, b_enc_ref, emb_ref,
    w_h_ref, w_f_ref, b_h_ref, w_out_ref, b_out_ref,
    # outputs
    seq_ref,        # (B, L)       int32   resident
    logit_ref,      # (1, B, V)    f32     per-step block
    prob_ref,       # (B, L)       f32     resident
    embed_ref,      # (1, B, D)    f32     per-step block
    fc_out_ref,     # (B, D)       f32     resident
    # scratch (persists across grid steps)
    emb_wh_scr,     # (Vemb, D) f32  : emb_table @ w_h   (computed at t==0)
    hbias_scr,      # (B, D)    f32  : fc @ w_f + b_h    (computed at t==0)
    prev_word_scr,  # (B, 1)    int32
    unfinished_scr, # (B, 1)    int32
):
    t = pl.program_id(0)
    B = hbias_scr.shape[0]
    V = w_out_ref.shape[1]
    Vemb = emb_ref.shape[0]
    L = seq_ref.shape[1]

    # ---- step 0: encoder + hoisted step-invariant matmuls + init carries ---
    @pl.when(t == 0)
    def _init():
        pooled = jnp.mean(attn_ref[...], axis=1)                       # (B, F)
        fc = jnp.tanh(
            jnp.dot(pooled, w_enc_ref[...], preferred_element_type=jnp.float32)
            + b_enc_ref[...]
        )                                                              # (B, D)
        fc_out_ref[...] = fc
        # step-invariant pieces of the decoder hidden state
        hbias_scr[...] = (
            jnp.dot(fc, w_f_ref[...], preferred_element_type=jnp.float32)
            + b_h_ref[...]
        )                                                              # (B, D)
        emb_wh_scr[...] = jnp.dot(emb_ref[...], w_h_ref[...],
                                  preferred_element_type=jnp.float32)  # (Vemb, D)
        prev_word_scr[...] = jnp.full(prev_word_scr.shape, START_IDX, jnp.int32)
        unfinished_scr[...] = jnp.ones(unfinished_scr.shape, jnp.int32)
        seq_ref[...] = jnp.full(seq_ref.shape, END_IDX, jnp.int32)
        prob_ref[...] = jnp.zeros(prob_ref.shape, jnp.float32)

    prev_word = prev_word_scr[...]                                     # (B, 1)

    # ---- fused embedding-gather + hidden projection: one-hot MXU matmul ----
    # onehot @ (emb @ w_h) == (onehot @ emb) @ w_h  (one-hot selection exact)
    onehot = (jax.lax.broadcasted_iota(jnp.int32, (B, Vemb), 1)
              == prev_word).astype(jnp.float32)                        # (B, Vemb)
    h = jnp.tanh(
        jnp.dot(onehot, emb_wh_scr[...], preferred_element_type=jnp.float32)
        + hbias_scr[...]
    )                                                                  # (B, D)
    # TODO(synk): weights could be bf16 (f32 accumulate) on v6e/v7x to halve
    # the one-time DMA; kept f32 for parity with the reference.
    logit = jnp.dot(h, w_out_ref[...],
                    preferred_element_type=jnp.float32) + b_out_ref[...]  # (B, V)

    # ---- greedy sampling without materializing log_softmax -----------------
    # max(log_softmax) == -lse (after max-shift); argmax(log_softmax) == argmax(logit)
    m = jnp.max(logit, axis=1, keepdims=True)                          # (B, 1)
    lse = jnp.log(jnp.sum(jnp.exp(logit - m), axis=1, keepdims=True))  # (B, 1)
    max_logprob = -lse                                                 # (B, 1)
    ids = jax.lax.broadcasted_iota(jnp.int32, logit.shape, 1)
    word = jnp.min(jnp.where(logit == m, ids, V), axis=1, keepdims=True)  # first max
    word = word.astype(jnp.int32)                                      # (B, 1)

    # ---- unfinished AND-accumulation + end_idx masking ----------------------
    unfinished = unfinished_scr[...] * (word != END_IDX).astype(jnp.int32)
    word_masked = jnp.where(unfinished == 1, word, END_IDX).astype(jnp.int32)
    unfinished_scr[...] = unfinished
    prev_word_scr[...] = word_masked

    # ---- per-step lane-dense outputs ----------------------------------------
    logit_ref[...] = logit[None, :, :]
    embed_ref[...] = h[None, :, :]

    # ---- resident outputs: column-t update via full-block select ------------
    col = jax.lax.broadcasted_iota(jnp.int32, (B, L), 1)
    seq_ref[...] = jnp.where(col == t, word_masked, seq_ref[...])
    prob_ref[...] = jnp.where(col == t, max_logprob, prob_ref[...])


# ----------------------------- wrapper --------------------------------------

def caption_model_inference(attn, params, max_length):
    """Greedy stepwise decoding (CaptionModel.stepwise_forward, mode='inference')."""
    B, T, Fdim = attn.shape
    D = params["w_h"].shape[1]
    V = params["w_out"].shape[1]
    Vemb = params["emb_table"].shape[0]

    # pad batch to a multiple of 8 (f32 sublane count) for full vreg utilization
    Bp = max(8, ((B + 7) // 8) * 8)
    if Bp != B:
        attn_p = jnp.zeros((Bp, T, Fdim), attn.dtype).at[:B].set(attn)
    else:
        attn_p = attn

    grid_spec = pltpu.PrefetchScalarGridSpec(
        num_scalar_prefetch=0,
        grid=(max_length,),
        in_specs=[
            pl.BlockSpec((Bp, T, Fdim), lambda t: (0, 0, 0)),   # attn
            pl.BlockSpec((Fdim, D), lambda t: (0, 0)),          # w_enc
            pl.BlockSpec((1, D), lambda t: (0, 0)),             # b_enc
            pl.BlockSpec((Vemb, D), lambda t: (0, 0)),          # emb_table
            pl.BlockSpec((D, D), lambda t: (0, 0)),             # w_h
            pl.BlockSpec((D, D), lambda t: (0, 0)),             # w_f
            pl.BlockSpec((1, D), lambda t: (0, 0)),             # b_h
            pl.BlockSpec((D, V), lambda t: (0, 0)),             # w_out
            pl.BlockSpec((1, V), lambda t: (0, 0)),             # b_out
        ],
        out_specs=[
            pl.BlockSpec((Bp, max_length), lambda t: (0, 0)),   # seq (resident)
            pl.BlockSpec((1, Bp, V), lambda t: (t, 0, 0)),      # logit, step-major
            pl.BlockSpec((Bp, max_length), lambda t: (0, 0)),   # sampled_logprob
            pl.BlockSpec((1, Bp, D), lambda t: (t, 0, 0)),      # embed, step-major
            pl.BlockSpec((Bp, D), lambda t: (0, 0)),            # fc_emb (resident)
        ],
        scratch_shapes=[
            pltpu.VMEM((Vemb, D), jnp.float32),  # emb_table @ w_h (hoisted)
            pltpu.VMEM((Bp, D), jnp.float32),    # fc @ w_f + b_h  (hoisted)
            pltpu.VMEM((Bp, 1), jnp.int32),      # prev_word carry
            pltpu.VMEM((Bp, 1), jnp.int32),      # unfinished carry
        ],
    )

    out_shapes = (
        jax.ShapeDtypeStruct((Bp, max_length), jnp.int32),
        jax.ShapeDtypeStruct((max_length, Bp, V), jnp.float32),
        jax.ShapeDtypeStruct((Bp, max_length), jnp.float32),
        jax.ShapeDtypeStruct((max_length, Bp, D), jnp.float32),
        jax.ShapeDtypeStruct((Bp, D), jnp.float32),
    )

    seq, logits_tbv, prob, embeds_tbd, fc_emb = pl.pallas_call(
        _fused_caption_kernel,
        grid_spec=grid_spec,
        out_shape=out_shapes,
        compiler_params=pltpu.CompilerParams(
            dimension_semantics=("arbitrary",)),   # t carries state -> sequential
    )(attn_p, params["w_enc"], params["b_enc"], params["emb_table"],
      params["w_h"], params["w_f"], params["b_h"],
      params["w_out"], params["b_out"])

    # TODO(synk): the torch loop breaks early once all rows emit end_idx; a
    # traced grid always runs max_length steps (seq/sampled_logprob are
    # identical; logit/embed beyond the break point are defined instead of
    # uninitialized torch.empty).
    return {
        "seq": seq[:B],
        "logit": jnp.transpose(logits_tbv, (1, 0, 2))[:B],
        "sampled_logprob": prob[:B],
        "embed": jnp.transpose(embeds_tbd, (1, 0, 2))[:B],
        "fc_emb": fc_emb[:B],   # encoder_output_dict merged into output
    }


# ----------------------------- parameter init -------------------------------

def init_params(key, feat_dim, d_model, vocab_size):
    ks = jax.random.split(key, 7)
    s = 0.1
    return {
        "w_enc": s * jax.random.normal(ks[0], (feat_dim, d_model), jnp.float32),
        "b_enc": s * jax.random.normal(ks[1], (1, d_model), jnp.float32),
        "emb_table": s * jax.random.normal(ks[2], (vocab_size, d_model), jnp.float32),
        "w_h": s * jax.random.normal(ks[3], (d_model, d_model), jnp.float32),
        "w_f": s * jax.random.normal(ks[4], (d_model, d_model), jnp.float32),
        "b_h": s * jax.random.normal(ks[5], (1, d_model), jnp.float32),
        "w_out": s * jax.random.normal(ks[6], (d_model, vocab_size), jnp.float32),
        "b_out": jnp.zeros((1, vocab_size), jnp.float32),
    }


# ----------------------------- main ------------------------------------------

if __name__ == "__main__":
    key = jax.random.PRNGKey(0)
    B, T, Fdim = 2, 16, 32       # batch, attn frames, attn feature dim
    D, V = 128, 128              # decoder.d_model (lane-dense), vocab_size
    MAX_LENGTH = 8

    k_attn, k_params = jax.random.split(key)
    attn = jax.random.normal(k_attn, (B, T, Fdim), jnp.float32)
    params = init_params(k_params, Fdim, D, V)

    out = caption_model_inference(attn, params, MAX_LENGTH)
    jax.block_until_ready(out)

    assert out["seq"].shape == (B, MAX_LENGTH)
    assert out["logit"].shape == (B, MAX_LENGTH, V)
    assert out["sampled_logprob"].shape == (B, MAX_LENGTH)
    assert out["embed"].shape == (B, MAX_LENGTH, D)
    assert out["fc_emb"].shape == (B, D)
    assert out["seq"].dtype == jnp.int32

    print("KERNEL_OK")
</pallas_src>

<mosaic_0001>
module attributes {stable_mosaic.version = 11 : i64} {
  func.func @_fused_caption_kernel(%arg0: i32, %arg1: memref<8x16x32xf32, #tpu.memory_space<vmem>>, %arg2: memref<32x128xf32, #tpu.memory_space<vmem>>, %arg3: memref<1x128xf32, #tpu.memory_space<vmem>>, %arg4: memref<128x128xf32, #tpu.memory_space<vmem>>, %arg5: memref<128x128xf32, #tpu.memory_space<vmem>>, %arg6: memref<128x128xf32, #tpu.memory_space<vmem>>, %arg7: memref<1x128xf32, #tpu.memory_space<vmem>>, %arg8: memref<128x128xf32, #tpu.memory_space<vmem>>, %arg9: memref<1x128xf32, #tpu.memory_space<vmem>>, %arg10: memref<8x8xi32, #tpu.memory_space<vmem>>, %arg11: memref<1x8x128xf32, #tpu.memory_space<vmem>>, %arg12: memref<8x8xf32, #tpu.memory_space<vmem>>, %arg13: memref<1x8x128xf32, #tpu.memory_space<vmem>>, %arg14: memref<8x128xf32, #tpu.memory_space<vmem>>, %arg15: memref<128x128xf32, #tpu.memory_space<vmem>>, %arg16: memref<8x128xf32, #tpu.memory_space<vmem>>, %arg17: memref<8x1xi32, #tpu.memory_space<vmem>>, %arg18: memref<8x1xi32, #tpu.memory_space<vmem>>) attributes {dimension_semantics = [#tpu.dimension_semantics<arbitrary>], iteration_bounds = array<i64: 8>, scalar_prefetch = 0 : i64, scratch_operands = 4 : i64, tpu.core_type = #tpu.core_type<tc>, window_params = [{pipeline_mode = #tpu.pipeline_mode<synchronous>, transform_indices = @transform_0, window_bounds = array<i64: 8, 16, 32>}, {pipeline_mode = #tpu.pipeline_mode<synchronous>, transform_indices = @transform_1, window_bounds = array<i64: 32, 128>}, {pipeline_mode = #tpu.pipeline_mode<synchronous>, transform_indices = @transform_2, window_bounds = array<i64: 1, 128>}, {pipeline_mode = #tpu.pipeline_mode<synchronous>, transform_indices = @transform_3, window_bounds = array<i64: 128, 128>}, {pipeline_mode = #tpu.pipeline_mode<synchronous>, transform_indices = @transform_4, window_bounds = array<i64: 128, 128>}, {pipeline_mode = #tpu.pipeline_mode<synchronous>, transform_indices = @transform_5, window_bounds = array<i64: 128, 128>}, {pipeline_mode = #tpu.pipeline_mode<synchronous>, transform_indices = @transform_6, window_bounds = array<i64: 1, 128>}, {pipeline_mode = #tpu.pipeline_mode<synchronous>, transform_indices = @transform_7, window_bounds = array<i64: 128, 128>}, {pipeline_mode = #tpu.pipeline_mode<synchronous>, transform_indices = @transform_8, window_bounds = array<i64: 1, 128>}, {pipeline_mode = #tpu.pipeline_mode<synchronous>, transform_indices = @transform_9, window_bounds = array<i64: 8, 8>}, {transform_indices = @transform_10, window_bounds = array<i64: 1, 8, 128>}, {pipeline_mode = #tpu.pipeline_mode<synchronous>, transform_indices = @transform_11, window_bounds = array<i64: 8, 8>}, {transform_indices = @transform_12, window_bounds = array<i64: 1, 8, 128>}, {pipeline_mode = #tpu.pipeline_mode<synchronous>, transform_indices = @transform_13, window_bounds = array<i64: 8, 128>}]} {
    %c0_i32 = arith.constant 0 : i32
    %0 = arith.cmpi eq, %arg0, %c0_i32 : i32
    %1 = arith.extui %0 : i1 to i32
    %c0_i32_0 = arith.constant 0 : i32
    %2 = arith.cmpi ne, %1, %c0_i32_0 : i32
    scf.if %2 {
      %c0_36 = arith.constant 0 : index
      %c0_37 = arith.constant 0 : index
      %c0_38 = arith.constant 0 : index
      %66 = vector.load %arg1[%c0_36, %c0_37, %c0_38] : memref<8x16x32xf32, #tpu.memory_space<vmem>>, vector<8x16x32xf32>
      %cst_39 = arith.constant dense<0.000000e+00> : vector<8x32xf32>
      %67 = vector.multi_reduction <add>, %66, %cst_39 [1] : vector<8x16x32xf32> to vector<8x32xf32>
      %cst_40 = arith.constant 1.600000e+01 : f32
      %68 = vector.broadcast %cst_40 : f32 to vector<8x32xf32>
      %69 = arith.divf %67, %68 : vector<8x32xf32>
      %c0_41 = arith.constant 0 : index
      %c0_42 = arith.constant 0 : index
      %70 = vector.load %arg2[%c0_41, %c0_42] : memref<32x128xf32, #tpu.memory_space<vmem>>, vector<32x128xf32>
      %cst_43 = arith.constant dense<0.000000e+00> : vector<8x128xf32>
      %71 = tpu.matmul %69, %70, %cst_43 {dimension_numbers = #tpu.dot_dimension_numbers<[1], [0], [0], [1], [0, 0, 1, 1], [], []>} : vector<8x32xf32>, vector<32x128xf32>, vector<8x128xf32> -> vector<8x128xf32>
      %c0_44 = arith.constant 0 : index
      %c0_45 = arith.constant 0 : index
      %72 = vector.load %arg3[%c0_44, %c0_45] : memref<1x128xf32, #tpu.memory_space<vmem>>, vector<1x128xf32>
      %73 = vector.broadcast %72 : vector<1x128xf32> to vector<8x128xf32>
      %74 = arith.addf %71, %73 : vector<8x128xf32>
      %75 = math.tanh %74 : vector<8x128xf32>
      %c0_46 = arith.constant 0 : index
      %c0_47 = arith.constant 0 : index
      %76 = vector.load %arg14[%c0_46, %c0_47] : memref<8x128xf32, #tpu.memory_space<vmem>>, vector<8x128xf32>
      tpu.vector_store %arg14[%c0_46, %c0_47], %75 {strides = array<i32>} : memref<8x128xf32, #tpu.memory_space<vmem>>, vector<8x128xf32>,
      %c0_48 = arith.constant 0 : index
      %c0_49 = arith.constant 0 : index
      %77 = vector.load %arg6[%c0_48, %c0_49] : memref<128x128xf32, #tpu.memory_space<vmem>>, vector<128x128xf32>
      %cst_50 = arith.constant dense<0.000000e+00> : vector<8x128xf32>
      %78 = tpu.matmul %75, %77, %cst_50 {dimension_numbers = #tpu.dot_dimension_numbers<[1], [0], [0], [1], [0, 0, 1, 1], [], []>} : vector<8x128xf32>, vector<128x128xf32>, vector<8x128xf32> -> vector<8x128xf32>
      %c0_51 = arith.constant 0 : index
      %c0_52 = arith.constant 0 : index
      %79 = vector.load %arg7[%c0_51, %c0_52] : memref<1x128xf32, #tpu.memory_space<vmem>>, vector<1x128xf32>
      %80 = vector.broadcast %79 : vector<1x128xf32> to vector<8x128xf32>
      %81 = arith.addf %78, %80 : vector<8x128xf32>
      %c0_53 = arith.constant 0 : index
      %c0_54 = arith.constant 0 : index
      %82 = vector.load %arg16[%c0_53, %c0_54] : memref<8x128xf32, #tpu.memory_space<vmem>>, vector<8x128xf32>
      tpu.vector_store %arg16[%c0_53, %c0_54], %81 {strides = array<i32>} : memref<8x128xf32, #tpu.memory_space<vmem>>, vector<8x128xf32>,
      %c0_55 = arith.constant 0 : index
      %c0_56 = arith.constant 0 : index
      %83 = vector.load %arg4[%c0_55, %c0_56] : memref<128x128xf32, #tpu.memory_space<vmem>>, vector<128x128xf32>
      %c0_57 = arith.constant 0 : index
      %c0_58 = arith.constant 0 : index
      %84 = vector.load %arg5[%c0_57, %c0_58] : memref<128x128xf32, #tpu.memory_space<vmem>>, vector<128x128xf32>
      %cst_59 = arith.constant dense<0.000000e+00> : vector<128x128xf32>
      %85 = tpu.matmul %83, %84, %cst_59 {dimension_numbers = #tpu.dot_dimension_numbers<[1], [0], [0], [1], [0, 0, 1, 1], [], []>} : vector<128x128xf32>, vector<128x128xf32>, vector<128x128xf32> -> vector<128x128xf32>
      %c0_60 = arith.constant 0 : index
      %c0_61 = arith.constant 0 : index
      %86 = vector.load %arg15[%c0_60, %c0_61] : memref<128x128xf32, #tpu.memory_space<vmem>>, vector<128x128xf32>
      tpu.vector_store %arg15[%c0_60, %c0_61], %85 {strides = array<i32>} : memref<128x128xf32, #tpu.memory_space<vmem>>, vector<128x128xf32>,
      %c1_i32_62 = arith.constant 1 : i32
      %87 = vector.broadcast %c1_i32_62 : i32 to vector<8x1xi32>
      %c0_63 = arith.constant 0 : index
      %c0_64 = arith.constant 0 : index
      %88 = vector.load %arg17[%c0_63, %c0_64] : memref<8x1xi32, #tpu.memory_space<vmem>>, vector<8x1xi32>
      tpu.vector_store %arg17[%c0_63, %c0_64], %87 {strides = array<i32>} : memref<8x1xi32, #tpu.memory_space<vmem>>, vector<8x1xi32>,
      %c1_i32_65 = arith.constant 1 : i32
      %89 = vector.broadcast %c1_i32_65 : i32 to vector<8x1xi32>
      %c0_66 = arith.constant 0 : index
      %c0_67 = arith.constant 0 : index
      %90 = vector.load %arg18[%c0_66, %c0_67] : memref<8x1xi32, #tpu.memory_space<vmem>>, vector<8x1xi32>
      tpu.vector_store %arg18[%c0_66, %c0_67], %89 {strides = array<i32>} : memref<8x1xi32, #tpu.memory_space<vmem>>, vector<8x1xi32>,
      %c2_i32_68 = arith.constant 2 : i32
      %91 = vector.broadcast %c2_i32_68 : i32 to vector<8x8xi32>
      %c0_69 = arith.constant 0 : index
      %c0_70 = arith.constant 0 : index
      %92 = vector.load %arg10[%c0_69, %c0_70] : memref<8x8xi32, #tpu.memory_space<vmem>>, vector<8x8xi32>
      tpu.vector_store %arg10[%c0_69, %c0_70], %91 {strides = array<i32>} : memref<8x8xi32, #tpu.memory_space<vmem>>, vector<8x8xi32>,
      %cst_71 = arith.constant 0.000000e+00 : f32
      %93 = vector.broadcast %cst_71 : f32 to vector<8x8xf32>
      %c0_72 = arith.constant 0 : index
      %c0_73 = arith.constant 0 : index
      %94 = vector.load %arg12[%c0_72, %c0_73] : memref<8x8xf32, #tpu.memory_space<vmem>>, vector<8x8xf32>
      tpu.vector_store %arg12[%c0_72, %c0_73], %93 {strides = array<i32>} : memref<8x8xf32, #tpu.memory_space<vmem>>, vector<8x8xf32>,
    } else {
    }
    %c0 = arith.constant 0 : index
    %c0_1 = arith.constant 0 : index
    %3 = vector.load %arg17[%c0, %c0_1] : memref<8x1xi32, #tpu.memory_space<vmem>>, vector<8x1xi32>
    %4 = tpu.iota {dimensions = array<i32: 1>} : vector<8x128xi32>
    %5 = vector.broadcast %3 : vector<8x1xi32> to vector<8x128xi32>
    %6 = arith.cmpi eq, %4, %5 : vector<8x128xi32>
    %7 = arith.extui %6 : vector<8x128xi1> to vector<8x128xi32>
    %8 = arith.sitofp %7 : vector<8x128xi32> to vector<8x128xf32>
    %c0_2 = arith.constant 0 : index
    %c0_3 = arith.constant 0 : index
    %9 = vector.load %arg15[%c0_2, %c0_3] : memref<128x128xf32, #tpu.memory_space<vmem>>, vector<128x128xf32>
    %cst = arith.constant dense<0.000000e+00> : vector<8x128xf32>
    %10 = tpu.matmul %8, %9, %cst {dimension_numbers = #tpu.dot_dimension_numbers<[1], [0], [0], [1], [0, 0, 1, 1], [], []>} : vector<8x128xf32>, vector<128x128xf32>, vector<8x128xf32> -> vector<8x128xf32>
    %c0_4 = arith.constant 0 : index
    %c0_5 = arith.constant 0 : index
    %11 = vector.load %arg16[%c0_4, %c0_5] : memref<8x128xf32, #tpu.memory_space<vmem>>, vector<8x128xf32>
    %12 = arith.addf %10, %11 : vector<8x128xf32>
    %13 = math.tanh %12 : vector<8x128xf32>
    %c0_6 = arith.constant 0 : index
    %c0_7 = arith.constant 0 : index
    %14 = vector.load %arg8[%c0_6, %c0_7] : memref<128x128xf32, #tpu.memory_space<vmem>>, vector<128x128xf32>
    %cst_8 = arith.constant dense<0.000000e+00> : vector<8x128xf32>
    %15 = tpu.matmul %13, %14, %cst_8 {dimension_numbers = #tpu.dot_dimension_numbers<[1], [0], [0], [1], [0, 0, 1, 1], [], []>} : vector<8x128xf32>, vector<128x128xf32>, vector<8x128xf32> -> vector<8x128xf32>
    %c0_9 = arith.constant 0 : index
    %c0_10 = arith.constant 0 : index
    %16 = vector.load %arg9[%c0_9, %c0_10] : memref<1x128xf32, #tpu.memory_space<vmem>>, vector<1x128xf32>
    %17 = vector.broadcast %16 : vector<1x128xf32> to vector<8x128xf32>
    %18 = arith.addf %15, %17 : vector<8x128xf32>
    %cst_11 = arith.constant dense<0xFF800000> : vector<8xf32>
    %19 = vector.multi_reduction <maximumf>, %18, %cst_11 [1] : vector<8x128xf32> to vector<8xf32>
    %20 = vector.shape_cast %19 : vector<8xf32> to vector<8x1xf32>
    %21 = vector.broadcast %20 : vector<8x1xf32> to vector<8x128xf32>
    %22 = arith.subf %18, %21 : vector<8x128xf32>
    %23 = math.exp %22 : vector<8x128xf32>
    %cst_12 = arith.constant dense<0.000000e+00> : vector<8xf32>
    %24 = vector.multi_reduction <add>, %23, %cst_12 [1] : vector<8x128xf32> to vector<8xf32>
    %25 = vector.shape_cast %24 : vector<8xf32> to vector<8x1xf32>
    %26 = math.log %25 : vector<8x1xf32>
    %cst_13 = arith.constant 0.000000e+00 : f32
    %27 = vector.broadcast %cst_13 : f32 to vector<8x1xf32>
    %28 = arith.subf %27, %26 : vector<8x1xf32>
    %29 = tpu.iota {dimensions = array<i32: 1>} : vector<8x128xi32>
    %30 = vector.broadcast %20 : vector<8x1xf32> to vector<8x128xf32>
    %31 = arith.cmpf oeq, %18, %30 : vector<8x128xf32>
    %c128_i32 = arith.constant 128 : i32
    %32 = vector.broadcast %c128_i32 : i32 to vector<8x128xi32>
    %33 = arith.select %31, %29, %32 : vector<8x128xi1>, vector<8x128xi32>
    %cst_14 = arith.constant dense<2147483647> : vector<8xi32>
    %34 = vector.multi_reduction <minsi>, %33, %cst_14 [1] : vector<8x128xi32> to vector<8xi32>
    %35 = vector.shape_cast %34 : vector<8xi32> to vector<8x1xi32>
    %c0_15 = arith.constant 0 : index
    %c0_16 = arith.constant 0 : index
    %36 = vector.load %arg18[%c0_15, %c0_16] : memref<8x1xi32, #tpu.memory_space<vmem>>, vector<8x1xi32>
    %c2_i32 = arith.constant 2 : i32
    %37 = vector.broadcast %c2_i32 : i32 to vector<8x1xi32>
    %38 = arith.cmpi ne, %35, %37 : vector<8x1xi32>
    %39 = arith.extui %38 : vector<8x1xi1> to vector<8x1xi32>
    %40 = arith.muli %36, %39 : vector<8x1xi32>
    %c1_i32 = arith.constant 1 : i32
    %41 = vector.broadcast %c1_i32 : i32 to vector<8x1xi32>
    %42 = arith.cmpi eq, %40, %41 : vector<8x1xi32>
    %c2_i32_17 = arith.constant 2 : i32
    %43 = vector.broadcast %c2_i32_17 : i32 to vector<8x1xi32>
    %44 = arith.select %42, %35, %43 : vector<8x1xi1>, vector<8x1xi32>
    %c0_18 = arith.constant 0 : index
    %c0_19 = arith.constant 0 : index
    %45 = vector.load %arg18[%c0_18, %c0_19] : memref<8x1xi32, #tpu.memory_space<vmem>>, vector<8x1xi32>
    tpu.vector_store %arg18[%c0_18, %c0_19], %40 {strides = array<i32>} : memref<8x1xi32, #tpu.memory_space<vmem>>, vector<8x1xi32>,
    %c0_20 = arith.constant 0 : index
    %c0_21 = arith.constant 0 : index
    %46 = vector.load %arg17[%c0_20, %c0_21] : memref<8x1xi32, #tpu.memory_space<vmem>>, vector<8x1xi32>
    tpu.vector_store %arg17[%c0_20, %c0_21], %44 {strides = array<i32>} : memref<8x1xi32, #tpu.memory_space<vmem>>, vector<8x1xi32>,
    %47 = vector.shape_cast %18 : vector<8x128xf32> to vector<1x8x128xf32>
    %c0_22 = arith.constant 0 : index
    %c0_23 = arith.constant 0 : index
    %c0_24 = arith.constant 0 : index
    %48 = vector.load %arg11[%c0_22, %c0_23, %c0_24] : memref<1x8x128xf32, #tpu.memory_space<vmem>>, vector<1x8x128xf32>
    tpu.vector_store %arg11[%c0_22, %c0_23, %c0_24], %47 {strides = array<i32>} : memref<1x8x128xf32, #tpu.memory_space<vmem>>, vector<1x8x128xf32>,
    %49 = vector.shape_cast %13 : vector<8x128xf32> to vector<1x8x128xf32>
    %c0_25 = arith.constant 0 : index
    %c0_26 = arith.constant 0 : index
    %c0_27 = arith.constant 0 : index
    %50 = vector.load %arg13[%c0_25, %c0_26, %c0_27] : memref<1x8x128xf32, #tpu.memory_space<vmem>>, vector<1x8x128xf32>
    tpu.vector_store %arg13[%c0_25, %c0_26, %c0_27], %49 {strides = array<i32>} : memref<1x8x128xf32, #tpu.memory_space<vmem>>, vector<1x8x128xf32>,
    %51 = tpu.iota {dimensions = array<i32: 1>} : vector<8x8xi32>
    %52 = vector.broadcast %arg0 : i32 to vector<8x8xi32>
    %53 = arith.cmpi eq, %51, %52 : vector<8x8xi32>
    %c0_28 = arith.constant 0 : index
    %c0_29 = arith.constant 0 : index
    %54 = vector.load %arg10[%c0_28, %c0_29] : memref<8x8xi32, #tpu.memory_space<vmem>>, vector<8x8xi32>
    %55 = vector.shape_cast %44 : vector<8x1xi32> to vector<8x1xi32>
    %56 = vector.broadcast %55 : vector<8x1xi32> to vector<8x8xi32>
    %57 = arith.select %53, %56, %54 : vector<8x8xi1>, vector<8x8xi32>
    %c0_30 = arith.constant 0 : index
    %c0_31 = arith.constant 0 : index
    %58 = vector.load %arg10[%c0_30, %c0_31] : memref<8x8xi32, #tpu.memory_space<vmem>>, vector<8x8xi32>
    tpu.vector_store %arg10[%c0_30, %c0_31], %57 {strides = array<i32>} : memref<8x8xi32, #tpu.memory_space<vmem>>, vector<8x8xi32>,
    %59 = vector.broadcast %arg0 : i32 to vector<8x8xi32>
    %60 = arith.cmpi eq, %51, %59 : vector<8x8xi32>
    %c0_32 = arith.constant 0 : index
    %c0_33 = arith.constant 0 : index
    %61 = vector.load %arg12[%c0_32, %c0_33] : memref<8x8xf32, #tpu.memory_space<vmem>>, vector<8x8xf32>
    %62 = vector.shape_cast %28 : vector<8x1xf32> to vector<8x1xf32>
    %63 = vector.broadcast %62 : vector<8x1xf32> to vector<8x8xf32>
    %64 = arith.select %60, %63, %61 : vector<8x8xi1>, vector<8x8xf32>
    %c0_34 = arith.constant 0 : index
    %c0_35 = arith.constant 0 : index
    %65 = vector.load %arg12[%c0_34, %c0_35] : memref<8x8xf32, #tpu.memory_space<vmem>>, vector<8x8xf32>
    tpu.vector_store %arg12[%c0_34, %c0_35], %64 {strides = array<i32>} : memref<8x8xf32, #tpu.memory_space<vmem>>, vector<8x8xf32>,
    return
  }
  func.func @transform_0(%arg0: i32) -> (i32, i32, i32) {
    %c0_i32 = arith.constant 0 : i32
    %c0_i32_0 = arith.constant 0 : i32
    %c0_i32_1 = arith.constant 0 : i32
    %c0_i32_2 = arith.constant 0 : i32
    return %c0_i32, %c0_i32_0, %c0_i32_1 : i32, i32, i32
  }
  func.func @transform_1(%arg0: i32) -> (i32, i32) {
    %c0_i32 = arith.constant 0 : i32
    %c0_i32_0 = arith.constant 0 : i32
    %c0_i32_1 = arith.constant 0 : i32
    return %c0_i32, %c0_i32_0 : i32, i32
  }
  func.func @transform_2(%arg0: i32) -> (i32, i32) {
    %c0_i32 = arith.constant 0 : i32
    %c0_i32_0 = arith.constant 0 : i32
    %c0_i32_1 = arith.constant 0 : i32
    return %c0_i32, %c0_i32_0 : i32, i32
  }
  func.func @transform_3(%arg0: i32) -> (i32, i32) {
    %c0_i32 = arith.constant 0 : i32
    %c0_i32_0 = arith.constant 0 : i32
    %c0_i32_1 = arith.constant 0 : i32
    return %c0_i32, %c0_i32_0 : i32, i32
  }
  func.func @transform_4(%arg0: i32) -> (i32, i32) {
    %c0_i32 = arith.constant 0 : i32
    %c0_i32_0 = arith.constant 0 : i32
    %c0_i32_1 = arith.constant 0 : i32
    return %c0_i32, %c0_i32_0 : i32, i32
  }
  func.func @transform_5(%arg0: i32) -> (i32, i32) {
    %c0_i32 = arith.constant 0 : i32
    %c0_i32_0 = arith.constant 0 : i32
    %c0_i32_1 = arith.constant 0 : i32
    return %c0_i32, %c0_i32_0 : i32, i32
  }
  func.func @transform_6(%arg0: i32) -> (i32, i32) {
    %c0_i32 = arith.constant 0 : i32
    %c0_i32_0 = arith.constant 0 : i32
    %c0_i32_1 = arith.constant 0 : i32
    return %c0_i32, %c0_i32_0 : i32, i32
  }
  func.func @transform_7(%arg0: i32) -> (i32, i32) {
    %c0_i32 = arith.constant 0 : i32
    %c0_i32_0 = arith.constant 0 : i32
    %c0_i32_1 = arith.constant 0 : i32
    return %c0_i32, %c0_i32_0 : i32, i32
  }
  func.func @transform_8(%arg0: i32) -> (i32, i32) {
    %c0_i32 = arith.constant 0 : i32
    %c0_i32_0 = arith.constant 0 : i32
    %c0_i32_1 = arith.constant 0 : i32
    return %c0_i32, %c0_i32_0 : i32, i32
  }
  func.func @transform_9(%arg0: i32) -> (i32, i32) {
    %c0_i32 = arith.constant 0 : i32
    %c0_i32_0 = arith.constant 0 : i32
    %c0_i32_1 = arith.constant 0 : i32
    return %c0_i32, %c0_i32_0 : i32, i32
  }
  func.func @transform_10(%arg0: i32) -> (i32, i32, i32) {
    %c0_i32 = arith.constant 0 : i32
    %c0_i32_0 = arith.constant 0 : i32
    %c0_i32_1 = arith.constant 0 : i32
    return %arg0, %c0_i32, %c0_i32_0 : i32, i32, i32
  }
  func.func @transform_11(%arg0: i32) -> (i32, i32) {
    %c0_i32 = arith.constant 0 : i32
    %c0_i32_0 = arith.constant 0 : i32
    %c0_i32_1 = arith.constant 0 : i32
    return %c0_i32, %c0_i32_0 : i32, i32
  }
  func.func @transform_12(%arg0: i32) -> (i32, i32, i32) {
    %c0_i32 = arith.constant 0 : i32
    %c0_i32_0 = arith.constant 0 : i32
    %c0_i32_1 = arith.constant 0 : i32
    return %arg0, %c0_i32, %c0_i32_0 : i32, i32, i32
  }
  func.func @transform_13(%arg0: i32) -> (i32, i32) {
    %c0_i32 = arith.constant 0 : i32
    %c0_i32_0 = arith.constant 0 : i32
    %c0_i32_1 = arith.constant 0 : i32
    return %c0_i32, %c0_i32_0 : i32, i32
  }
}

</mosaic_0001>

<llo_original>
// kernel: tpu_custom_call.1
$region0: #{tpu_custom_call.1}
  #allocation0 [shape = 'u32[]', space=smem, size = 0x4, offset = 0x4, fixed_abs, tag = 'smem constant byte address 0x4 - core index']
  #allocation1 [shape = 'u32[144,128]{1,0:T(1,128)}', space=vmem, size = 0x12000, scoped, tag = 'internal scratch']
  #allocation2 [shape = 'f32[128,128]{1,0:T(8,128)}', space=vmem, size = 0x10000, scoped, tag = 'scratch operand']
  #allocation3 [shape = 'f32[8,128]{1,0:T(8,128)}', space=vmem, size = 0x1000, scoped, tag = 'scratch operand']
  #allocation4 [shape = 's32[8,1]{1,0:T(8,128)}', space=vmem, size = 0x1000, scoped, tag = 'scratch operand']
  #allocation5 [shape = 's32[8,1]{1,0:T(8,128)}', space=vmem, size = 0x1000, scoped, tag = 'scratch operand']
  %s0 = inlined_call_operand.hbm [shape: f32[8,16,32], index: 0, kind: input, shape index: {}]
  %s1 = inlined_call_operand.hbm [shape: f32[32,128], index: 1, kind: input, shape index: {}]
  %s2 = inlined_call_operand.vmem [shape: f32[1,128], index: 2, kind: input, shape index: {}]
  %s3 = inlined_call_operand.hbm [shape: f32[128,128], index: 3, kind: input, shape index: {}]
  %s4 = inlined_call_operand.hbm [shape: f32[128,128], index: 4, kind: input, shape index: {}]
  %s5 = inlined_call_operand.hbm [shape: f32[128,128], index: 5, kind: input, shape index: {}]
  %s6 = inlined_call_operand.vmem [shape: f32[1,128], index: 6, kind: input, shape index: {}]
  %s7 = inlined_call_operand.hbm [shape: f32[128,128], index: 7, kind: input, shape index: {}]
  %s8 = inlined_call_operand.vmem [shape: f32[1,128], index: 8, kind: input, shape index: {}]
  %s9 = inlined_call_operand.hbm [shape: s32[8,8], index: 9, kind: output, shape index: {0}]
  %s10 = inlined_call_operand.hbm [shape: f32[8,8,128], index: 10, kind: output, shape index: {1}]
  %s11 = inlined_call_operand.hbm [shape: f32[8,8], index: 11, kind: output, shape index: {2}]
  %s12 = inlined_call_operand.hbm [shape: f32[8,8,128], index: 12, kind: output, shape index: {3}]
  %s13 = inlined_call_operand.hbm [shape: f32[8,128], index: 13, kind: output, shape index: {4}]
  %14 = xla_tuple %s9, %s10, %s11, %s12, %s13
  %s15 = sld [smem:[#allocation0]]
  $region129: #{tpu_custom_call.1} parent=0
    _
  %s17 = ssub.s32 1, %s15
  %s18 = scalar_select 0, %s17, %s15
  $region1: #{tpu_custom_call.1} parent=0
    #allocation6 [shape = 'u8[65536]{0}', space=vmem, size = 0x10000, scoped, tag = 'input window, operand 0, single buffered']
    #allocation7 [shape = 's32[2]{0}', space=sflag, size = 0x8, scoped, tag = 'scoped memory for tpu_custom_call.1']
    #allocation8 [shape = 's32[2]{0}', space=sflag, size = 0x8, scoped, tag = 'scoped memory for tpu_custom_call.1']
    #allocation9 [shape = 'u8[16384]{0}', space=vmem, size = 0x4000, scoped, tag = 'input window, operand 1, single buffered']
    #allocation10 [shape = 's32[1]{0}', space=sflag, size = 0x4, scoped, tag = 'scoped memory for tpu_custom_call.1']
    #allocation11 [shape = 'u8[65536]{0}', space=vmem, size = 0x10000, scoped, tag = 'input window, operand 3, single buffered']
    #allocation12 [shape = 'u8[65536]{0}', space=vmem, size = 0x10000, scoped, tag = 'input window, operand 4, single buffered']
    #allocation13 [shape = 's32[1]{0}', space=sflag, size = 0x4, scoped, tag = 'scoped memory for tpu_custom_call.1']
    #allocation14 [shape = 'u8[65536]{0}', space=vmem, size = 0x10000, scoped, tag = 'input window, operand 5, single buffered']
    #allocation15 [shape = 'u8[65536]{0}', space=vmem, size = 0x10000, scoped, tag = 'input window, operand 7, single buffered']
    #allocation16 [shape = 's32[1]{0}', space=sflag, size = 0x4, scoped, tag = 'scoped memory for tpu_custom_call.1']
    #allocation17 [shape = 'u8[4096]{0}', space=vmem, size = 0x1000, scoped, tag = 'output window, operand 0, single buffered']
    #allocation18 [shape = 'u8[8192]{0}', space=vmem, size = 0x2000, scoped, tag = 'output window, operand 1']
    #allocation19 [shape = 's32[2]{0}', space=sflag, size = 0x8, scoped, tag = 'scoped memory for tpu_custom_call.1']
    #allocation20 [shape = 'u8[4096]{0}', space=vmem, size = 0x1000, scoped, tag = 'output window, operand 2, single buffered']
    #allocation21 [shape = 'u8[8192]{0}', space=vmem, size = 0x2000, scoped, tag = 'output window, operand 3']
    #allocation22 [shape = 's32[2]{0}', space=sflag, size = 0x8, scoped, tag = 'scoped memory for tpu_custom_call.1']
    #allocation23 [shape = 'u8[4096]{0}', space=vmem, size = 0x1000, scoped, tag = 'output window, operand 4, single buffered']
    %19 = vsyncpa [#allocation7], 0
    %20 = vsyncpa [#allocation10], 0
    %21 = vsyncpa [#allocation13], 0
    %22 = vsyncpa [#allocation16], 0
    %23 = vsyncpa [#allocation8], 0
    %24 = vsyncpa [#allocation19], 0
    %s25 = scalar_lea.sflag [#allocation19], 1
    %26 = vsyncpa %s25, 0
    %27 = vsyncpa [#allocation22], 0
    %s28 = scalar_lea.sflag [#allocation22], 1
    %29 = vsyncpa %s28, 0
    loop: start=0, step=1, limit=10
    $region2: #{tpu_custom_call.1} parent=1 // loop_pre_header
      _
    $region3: #{tpu_custom_call.1} parent=1 // loop_header
      %s31 = sphi 0, %s35
      %p32 = scmp.ge.s32.totalorder %s31, 10
      %s39 = sphi 0, %s39
      %s41 = sphi 0, %s39
      %s42 = sphi 0, %s41
      %s56 = sphi 0, %s42
      %s60 = sphi 0, %s60
      %s62 = sphi 0, %s60
      %s63 = sphi 0, %s62
      %s77 = sphi 0, %s63
      %s81 = sphi 0, %s81
      %s83 = sphi 0, %s81
      %s84 = sphi 0, %s83
      %s98 = sphi 0, %s84
      %s102 = sphi 0, %s102
      %s104 = sphi 0, %s102
      %s105 = sphi 0, %s104
      %s119 = sphi 0, %s105
      %s123 = sphi 0, %s123
      %s125 = sphi 0, %s123
      %s126 = sphi 0, %s125
      %s140 = sphi 0, %s126
      %s144 = sphi 0, %s144
      %s146 = sphi 0, %s144
      %s147 = sphi 0, %s146
      %s161 = sphi 0, %s147
      %s165 = sphi 0, %s165
      %s167 = sphi 0, %s165
      %s168 = sphi 0, %s167
      %s182 = sphi 0, %s168
      %s186 = sphi 0, %s186
      %s188 = sphi 0, %s186
      %s189 = sphi 0, %s188
      %s203 = sphi 0, %s189
      %s207 = sphi 0, %s207
      %s209 = sphi 0, %s207
      %s210 = sphi 0, %s209
      %s224 = sphi 0, %s210
      %s228 = sphi 0, %s228
      %s230 = sphi 0, %s228
      %s231 = sphi 0, %s230
      %s245 = sphi 0, %s231
      %s251 = sphi 0, %s253
      %s254 = sphi 0, %s251
      %s255 = sphi 0, %s254
      %s271 = sphi 0, %s255
      %s275 = sphi 0, %s275
      %s277 = sphi 0, %s275
      %s278 = sphi 0, %s277
      %s292 = sphi 0, %s278
      %s298 = sphi 0, %s300
      %s301 = sphi 0, %s298
      %s302 = sphi 0, %s301
      %s318 = sphi 0, %s302
      %s322 = sphi 0, %s322
      %s324 = sphi 0, %s322
      %s325 = sphi 0, %s324
      %s339 = sphi 0, %s325
    $region4: #{tpu_custom_call.1} parent=1 // loop_header_branch
      %34 = sbr.rel (%p32) target = $region8
    $region5: #{tpu_custom_call.1} parent=1 // loop_body
      %s36 = ssub.s32 %s31, 1
      %s37 = ssub.s32 %s31, 2
      %s38 = sadd.s32 %s31, 1
      %s40 = sadd.s32 %s39, 1
      %p43 = scmp.eq.s32.totalorder %s31, 7
      %p44 = scmp.ne.s32.totalorder %s39, %s41
      %p45 = scmp.eq.s32.totalorder %s31, 0
      %p46 = por %p44, %p45
      %p47 = scmp.ne.s32.totalorder %s39, %s41
      %p48 = scmp.eq.s32.totalorder %s36, 7
      %p49 = por %p47, %p48
      %p50 = scmp.ne.s32.totalorder %s41, %s42
      %p51 = scmp.eq.s32.totalorder %s36, 0
      %p52 = por %p50, %p51
      %p53 = scmp.ne.s32.totalorder %s41, %s42
      %p54 = scmp.eq.s32.totalorder %s37, 7
      %p55 = por %p53, %p54
      %p57 = scmp.ne.s32.totalorder %s42, %s56
      %p58 = scmp.eq.s32.totalorder %s37, 0
      %p59 = por %p57, %p58
      %s61 = sadd.s32 %s60, 1
      %p64 = scmp.eq.s32.totalorder %s31, 7
      %p65 = scmp.ne.s32.totalorder %s60, %s62
      %p66 = scmp.eq.s32.totalorder %s31, 0
      %p67 = por %p65, %p66
      %p68 = scmp.ne.s32.totalorder %s60, %s62
      %p69 = scmp.eq.s32.totalorder %s36, 7
      %p70 = por %p68, %p69
      %p71 = scmp.ne.s32.totalorder %s62, %s63
      %p72 = scmp.eq.s32.totalorder %s36, 0
      %p73 = por %p71, %p72
      %p74 = scmp.ne.s32.totalorder %s62, %s63
      %p75 = scmp.eq.s32.totalorder %s37, 7
      %p76 = por %p74, %p75
      %p78 = scmp.ne.s32.totalorder %s63, %s77
      %p79 = scmp.eq.s32.totalorder %s37, 0
      %p80 = por %p78, %p79
      %s82 = sadd.s32 %s81, 1
      %p85 = scmp.eq.s32.totalorder %s31, 7
      %p86 = scmp.ne.s32.totalorder %s81, %s83
      %p87 = scmp.eq.s32.totalorder %s31, 0
      %p88 = por %p86, %p87
      %p89 = scmp.ne.s32.totalorder %s81, %s83
      %p90 = scmp.eq.s32.totalorder %s36, 7
      %p91 = por %p89, %p90
      %p92 = scmp.ne.s32.totalorder %s83, %s84
      %p93 = scmp.eq.s32.totalorder %s36, 0
      %p94 = por %p92, %p93
      %p95 = scmp.ne.s32.totalorder %s83, %s84
      %p96 = scmp.eq.s32.totalorder %s37, 7
      %p97 = por %p95, %p96
      %p99 = scmp.ne.s32.totalorder %s84, %s98
      %p100 = scmp.eq.s32.totalorder %s37, 0
      %p101 = por %p99, %p100
      %s103 = sadd.s32 %s102, 1
      %p106 = scmp.eq.s32.totalorder %s31, 7
      %p107 = scmp.ne.s32.totalorder %s102, %s104
      %p108 = scmp.eq.s32.totalorder %s31, 0
      %p109 = por %p107, %p108
      %p110 = scmp.ne.s32.totalorder %s102, %s104
      %p111 = scmp.eq.s32.totalorder %s36, 7
      %p112 = por %p110, %p111
      %p113 = scmp.ne.s32.totalorder %s104, %s105
      %p114 = scmp.eq.s32.totalorder %s36, 0
      %p115 = por %p113, %p114
      %p116 = scmp.ne.s32.totalorder %s104, %s105
      %p117 = scmp.eq.s32.totalorder %s37, 7
      %p118 = por %p116, %p117
      %p120 = scmp.ne.s32.totalorder %s105, %s119
      %p121 = scmp.eq.s32.totalorder %s37, 0
      %p122 = por %p120, %p121
      %s124 = sadd.s32 %s123, 1
      %p127 = scmp.eq.s32.totalorder %s31, 7
      %p128 = scmp.ne.s32.totalorder %s123, %s125
      %p129 = scmp.eq.s32.totalorder %s31, 0
      %p130 = por %p128, %p129
      %p131 = scmp.ne.s32.totalorder %s123, %s125
      %p132 = scmp.eq.s32.totalorder %s36, 7
      %p133 = por %p131, %p132
      %p134 = scmp.ne.s32.totalorder %s125, %s126
      %p135 = scmp.eq.s32.totalorder %s36, 0
      %p136 = por %p134, %p135
      %p137 = scmp.ne.s32.totalorder %s125, %s126
      %p138 = scmp.eq.s32.totalorder %s37, 7
      %p139 = por %p137, %p138
      %p141 = scmp.ne.s32.totalorder %s126, %s140
      %p142 = scmp.eq.s32.totalorder %s37, 0
      %p143 = por %p141, %p142
      %s145 = sadd.s32 %s144, 1
      %p148 = scmp.eq.s32.totalorder %s31, 7
      %p149 = scmp.ne.s32.totalorder %s144, %s146
      %p150 = scmp.eq.s32.totalorder %s31, 0
      %p151 = por %p149, %p150
      %p152 = scmp.ne.s32.totalorder %s144, %s146
      %p153 = scmp.eq.s32.totalorder %s36, 7
      %p154 = por %p152, %p153
      %p155 = scmp.ne.s32.totalorder %s146, %s147
      %p156 = scmp.eq.s32.totalorder %s36, 0
      %p157 = por %p155, %p156
      %p158 = scmp.ne.s32.totalorder %s146, %s147
      %p159 = scmp.eq.s32.totalorder %s37, 7
      %p160 = por %p158, %p159
      %p162 = scmp.ne.s32.totalorder %s147, %s161
      %p163 = scmp.eq.s32.totalorder %s37, 0
      %p164 = por %p162, %p163
      %s166 = sadd.s32 %s165, 1
      %p169 = scmp.eq.s32.totalorder %s31, 7
      %p170 = scmp.ne.s32.totalorder %s165, %s167
      %p171 = scmp.eq.s32.totalorder %s31, 0
      %p172 = por %p170, %p171
      %p173 = scmp.ne.s32.totalorder %s165, %s167
      %p174 = scmp.eq.s32.totalorder %s36, 7
      %p175 = por %p173, %p174
      %p176 = scmp.ne.s32.totalorder %s167, %s168
      %p177 = scmp.eq.s32.totalorder %s36, 0
      %p178 = por %p176, %p177
      %p179 = scmp.ne.s32.totalorder %s167, %s168
      %p180 = scmp.eq.s32.totalorder %s37, 7
      %p181 = por %p179, %p180
      %p183 = scmp.ne.s32.totalorder %s168, %s182
      %p184 = scmp.eq.s32.totalorder %s37, 0
      %p185 = por %p183, %p184
      %s187 = sadd.s32 %s186, 1
      %p190 = scmp.eq.s32.totalorder %s31, 7
      %p191 = scmp.ne.s32.totalorder %s186, %s188
      %p192 = scmp.eq.s32.totalorder %s31, 0
      %p193 = por %p191, %p192
      %p194 = scmp.ne.s32.totalorder %s186, %s188
      %p195 = scmp.eq.s32.totalorder %s36, 7
      %p196 = por %p194, %p195
      %p197 = scmp.ne.s32.totalorder %s188, %s189
      %p198 = scmp.eq.s32.totalorder %s36, 0
      %p199 = por %p197, %p198
      %p200 = scmp.ne.s32.totalorder %s188, %s189
      %p201 = scmp.eq.s32.totalorder %s37, 7
      %p202 = por %p200, %p201
      %p204 = scmp.ne.s32.totalorder %s189, %s203
      %p205 = scmp.eq.s32.totalorder %s37, 0
      %p206 = por %p204, %p205
      %s208 = sadd.s32 %s207, 1
      %p211 = scmp.eq.s32.totalorder %s31, 7
      %p212 = scmp.ne.s32.totalorder %s207, %s209
      %p213 = scmp.eq.s32.totalorder %s31, 0
      %p214 = por %p212, %p213
      %p215 = scmp.ne.s32.totalorder %s207, %s209
      %p216 = scmp.eq.s32.totalorder %s36, 7
      %p217 = por %p215, %p216
      %p218 = scmp.ne.s32.totalorder %s209, %s210
      %p219 = scmp.eq.s32.totalorder %s36, 0
      %p220 = por %p218, %p219
      %p221 = scmp.ne.s32.totalorder %s209, %s210
      %p222 = scmp.eq.s32.totalorder %s37, 7
      %p223 = por %p221, %p222
      %p225 = scmp.ne.s32.totalorder %s210, %s224
      %p226 = scmp.eq.s32.totalorder %s37, 0
      %p227 = por %p225, %p226
      %s229 = sadd.s32 %s228, 1
      %p232 = scmp.eq.s32.totalorder %s31, 7
      %p233 = scmp.ne.s32.totalorder %s228, %s230
      %p234 = scmp.eq.s32.totalorder %s31, 0
      %p235 = por %p233, %p234
      %p236 = scmp.ne.s32.totalorder %s228, %s230
      %p237 = scmp.eq.s32.totalorder %s36, 7
      %p238 = por %p236, %p237
      %p239 = scmp.ne.s32.totalorder %s230, %s231
      %p240 = scmp.eq.s32.totalorder %s36, 0
      %p241 = por %p239, %p240
      %p242 = scmp.ne.s32.totalorder %s230, %s231
      %p243 = scmp.eq.s32.totalorder %s37, 7
      %p244 = por %p242, %p243
      %p246 = scmp.ne.s32.totalorder %s231, %s245
      %p247 = scmp.eq.s32.totalorder %s37, 0
      %p248 = por %p246, %p247
      %s249 = ssub.s32 %s31, %s38
      %p250 = scmp.eq.s32.totalorder %s249, 0
      %s252 = sadd.s32 %s251, 1
      %s253 = scalar_select %p250, %s251, %s252
      %p256 = pneg %p250
      %p257 = scmp.eq.s32.totalorder %s31, 7
      %p258 = por %p256, %p257
      %p259 = scmp.ne.s32.totalorder %s251, %s254
      %p260 = scmp.eq.s32.totalorder %s31, 0
      %p261 = por %p259, %p260
      %p262 = scmp.ne.s32.totalorder %s251, %s254
      %p263 = scmp.eq.s32.totalorder %s36, 7
      %p264 = por %p262, %p263
      %p265 = scmp.ne.s32.totalorder %s254, %s255
      %p266 = scmp.eq.s32.totalorder %s36, 0
      %p267 = por %p265, %p266
      %p268 = scmp.ne.s32.totalorder %s254, %s255
      %p269 = scmp.eq.s32.totalorder %s37, 7
      %p270 = por %p268, %p269
      %p272 = scmp.ne.s32.totalorder %s255, %s271
      %p273 = scmp.eq.s32.totalorder %s37, 0
      %p274 = por %p272, %p273
      %s276 = sadd.s32 %s275, 1
      %p279 = scmp.eq.s32.totalorder %s31, 7
      %p280 = scmp.ne.s32.totalorder %s275, %s277
      %p281 = scmp.eq.s32.totalorder %s31, 0
      %p282 = por %p280, %p281
      %p283 = scmp.ne.s32.totalorder %s275, %s277
      %p284 = scmp.eq.s32.totalorder %s36, 7
      %p285 = por %p283, %p284
      %p286 = scmp.ne.s32.totalorder %s277, %s278
      %p287 = scmp.eq.s32.totalorder %s36, 0
      %p288 = por %p286, %p287
      %p289 = scmp.ne.s32.totalorder %s277, %s278
      %p290 = scmp.eq.s32.totalorder %s37, 7
      %p291 = por %p289, %p290
      %p293 = scmp.ne.s32.totalorder %s278, %s292
      %p294 = scmp.eq.s32.totalorder %s37, 0
      %p295 = por %p293, %p294
      %s296 = ssub.s32 %s31, %s38
      %p297 = scmp.eq.s32.totalorder %s296, 0
      %s299 = sadd.s32 %s298, 1
      %s300 = scalar_select %p297, %s298, %s299
      %p303 = pneg %p297
      %p304 = scmp.eq.s32.totalorder %s31, 7
      %p305 = por %p303, %p304
      %p306 = scmp.ne.s32.totalorder %s298, %s301
      %p307 = scmp.eq.s32.totalorder %s31, 0
      %p308 = por %p306, %p307
      %p309 = scmp.ne.s32.totalorder %s298, %s301
      %p310 = scmp.eq.s32.totalorder %s36, 7
      %p311 = por %p309, %p310
      %p312 = scmp.ne.s32.totalorder %s301, %s302
      %p313 = scmp.eq.s32.totalorder %s36, 0
      %p314 = por %p312, %p313
      %p315 = scmp.ne.s32.totalorder %s301, %s302
      %p316 = scmp.eq.s32.totalorder %s37, 7
      %p317 = por %p315, %p316
      %p319 = scmp.ne.s32.totalorder %s302, %s318
      %p320 = scmp.eq.s32.totalorder %s37, 0
      %p321 = por %p319, %p320
      %s323 = sadd.s32 %s322, 1
      %p326 = scmp.eq.s32.totalorder %s31, 7
      %p327 = scmp.ne.s32.totalorder %s322, %s324
      %p328 = scmp.eq.s32.totalorder %s31, 0
      %p329 = por %p327, %p328
      %p330 = scmp.ne.s32.totalorder %s322, %s324
      %p331 = scmp.eq.s32.totalorder %s36, 7
      %p332 = por %p330, %p331
      %p333 = scmp.ne.s32.totalorder %s324, %s325
      %p334 = scmp.eq.s32.totalorder %s36, 0
      %p335 = por %p333, %p334
      %p336 = scmp.ne.s32.totalorder %s324, %s325
      %p337 = scmp.eq.s32.totalorder %s37, 7
      %p338 = por %p336, %p337
      %p340 = scmp.ne.s32.totalorder %s325, %s339
      %p341 = scmp.eq.s32.totalorder %s37, 0
      %p342 = por %p340, %p341
      %p343 = scmp.le.s32.totalorder 1, %s31
      %p344 = scmp.lt.s32.totalorder %s31, 9
      %p345 = pnand %p343, %p344
      %p346 = pneg %p345
      // Predicated region
      $region9: #{tpu_custom_call.1} parent=5 // pred_check
        _
      $region10: #{tpu_custom_call.1} parent=5 // pred_check_branch
        %348 = sbr.rel (%p345) target = $region12
      $region11: #{tpu_custom_call.1} parent=5 // pred_region
        %s349 = ssub.s32 %s31, 1
        // Predicated region
        $region13: #{tpu_custom_call.1} parent=11 // pred_check
          %p350 = pneg %p52
        $region14: #{tpu_custom_call.1} parent=11 // pred_check_branch
          %352 = sbr.rel (%p350) target = $region16
        $region15: #{tpu_custom_call.1} parent=11 // pred_region
          %s354 = ssub.s32 2048, 2048
          %355 = vsyncadd [#allocation7], %s354
          %s356 = sshll.u32 [#allocation6], 4
          %s357 = int_to_ptr.vmem [resolvable:$true] %s356
          %362 = dma.hbm_to_vmem [thread:$0]  %s0, 2048, %s357, [#allocation7], 128, 128, 8
        $region16: #{tpu_custom_call.1} parent=11 // pred_fallthru
          _
        // Predicated region
        $region17: #{tpu_custom_call.1} parent=11 // pred_check
          %p363 = pneg %p73
        $region18: #{tpu_custom_call.1} parent=11 // pred_check_branch
          %365 = sbr.rel (%p363) target = $region20
        $region19: #{tpu_custom_call.1} parent=11 // pred_region
          %s367 = ssub.s32 512, 512
          %368 = vsyncadd [#allocation10], %s367
          %s369 = sshll.u32 [#allocation9], 4
          %s370 = int_to_ptr.vmem [resolvable:$true] %s369
          %375 = dma.hbm_to_vmem [thread:$0]  %s1, 512, %s370, [#allocation10], 128, 128, 8
        $region20: #{tpu_custom_call.1} parent=11 // pred_fallthru
          _
        // Predicated region
        $region21: #{tpu_custom_call.1} parent=11 // pred_check
          %p376 = pneg %p94
        $region22: #{tpu_custom_call.1} parent=11 // pred_check_branch
          %378 = sbr.rel (%p376) target = $region24
        $region23: #{tpu_custom_call.1} parent=11 // pred_region
          _
        $region24: #{tpu_custom_call.1} parent=11 // pred_fallthru
          _
        // Predicated region
        $region25: #{tpu_custom_call.1} parent=11 // pred_check
          %p379 = pneg %p115
        $region26: #{tpu_custom_call.1} parent=11 // pred_check_branch
          %381 = sbr.rel (%p379) target = $region28
        $region27: #{tpu_custom_call.1} parent=11 // pred_region
          %s383 = ssub.s32 2048, 2048
          %384 = vsyncadd [#allocation10], %s383
          %s385 = sshll.u32 [#allocation11], 4
          %s386 = int_to_ptr.vmem [resolvable:$true] %s385
          %391 = dma.hbm_to_vmem [thread:$0]  %s3, 2048, %s386, [#allocation10], 128, 128, 8
        $region28: #{tpu_custom_call.1} parent=11 // pred_fallthru
          _
        // Predicated region
        $region29: #{tpu_custom_call.1} parent=11 // pred_check
          %p392 = pneg %p136
        $region30: #{tpu_custom_call.1} parent=11 // pred_check_branch
          %394 = sbr.rel (%p392) target = $region32
        $region31: #{tpu_custom_call.1} parent=11 // pred_region
          %s396 = ssub.s32 2048, 2048
          %397 = vsyncadd [#allocation13], %s396
          %s398 = sshll.u32 [#allocation12], 4
          %s399 = int_to_ptr.vmem [resolvable:$true] %s398
          %404 = dma.hbm_to_vmem [thread:$0]  %s4, 2048, %s399, [#allocation13], 128, 128, 8
        $region32: #{tpu_custom_call.1} parent=11 // pred_fallthru
          _
        // Predicated region
        $region33: #{tpu_custom_call.1} parent=11 // pred_check
          %p405 = pneg %p157
        $region34: #{tpu_custom_call.1} parent=11 // pred_check_branch
          %407 = sbr.rel (%p405) target = $region36
        $region35: #{tpu_custom_call.1} parent=11 // pred_region
          %s409 = ssub.s32 2048, 2048
          %410 = vsyncadd [#allocation13], %s409
          %s411 = sshll.u32 [#allocation14], 4
          %s412 = int_to_ptr.vmem [resolvable:$true] %s411
          %417 = dma.hbm_to_vmem [thread:$0]  %s5, 2048, %s412, [#allocation13], 128, 128, 8
        $region36: #{tpu_custom_call.1} parent=11 // pred_fallthru
          _
        // Predicated region
        $region37: #{tpu_custom_call.1} parent=11 // pred_check
          %p418 = pneg %p178
        $region38: #{tpu_custom_call.1} parent=11 // pred_check_branch
          %420 = sbr.rel (%p418) target = $region40
        $region39: #{tpu_custom_call.1} parent=11 // pred_region
          _
        $region40: #{tpu_custom_call.1} parent=11 // pred_fallthru
          _
        // Predicated region
        $region41: #{tpu_custom_call.1} parent=11 // pred_check
          %p421 = pneg %p199
        $region42: #{tpu_custom_call.1} parent=11 // pred_check_branch
          %423 = sbr.rel (%p421) target = $region44
        $region43: #{tpu_custom_call.1} parent=11 // pred_region
          %s425 = ssub.s32 2048, 2048
          %426 = vsyncadd [#allocation16], %s425
          %s427 = sshll.u32 [#allocation15], 4
          %s428 = int_to_ptr.vmem [resolvable:$true] %s427
          %433 = dma.hbm_to_vmem [thread:$0]  %s7, 2048, %s428, [#allocation16], 128, 128, 8
        $region44: #{tpu_custom_call.1} parent=11 // pred_fallthru
          _
        // Predicated region
        $region45: #{tpu_custom_call.1} parent=11 // pred_check
          %p434 = pneg %p220
        $region46: #{tpu_custom_call.1} parent=11 // pred_check_branch
          %436 = sbr.rel (%p434) target = $region48
        $region47: #{tpu_custom_call.1} parent=11 // pred_region
          _
        $region48: #{tpu_custom_call.1} parent=11 // pred_fallthru
          _
      $region12: #{tpu_custom_call.1} parent=5 // pred_fallthru
        _
      %p437 = scmp.lt.s32.totalorder %s31, 8
      // Predicated region
      $region49: #{tpu_custom_call.1} parent=5 // pred_check
        %p438 = pneg %p437
      $region50: #{tpu_custom_call.1} parent=5 // pred_check_branch
        %440 = sbr.rel (%p438) target = $region52
      $region51: #{tpu_custom_call.1} parent=5 // pred_region
        _
      $region52: #{tpu_custom_call.1} parent=5 // pred_fallthru
        _
      %p441 = scmp.le.s32.totalorder 1, %s31
      %p442 = scmp.lt.s32.totalorder %s31, 9
      %p443 = pnand %p441, %p442
      %p444 = pneg %p443
      // Predicated region
      $region53: #{tpu_custom_call.1} parent=5 // pred_check
        _
      $region54: #{tpu_custom_call.1} parent=5 // pred_check_branch
        %446 = sbr.rel (%p443) target = $region56
      $region55: #{tpu_custom_call.1} parent=5 // pred_region
        %s447 = ssub.s32 %s31, 1
        // Predicated region
        $region57: #{tpu_custom_call.1} parent=55 // pred_check
          %p448 = pneg %p52
        $region58: #{tpu_custom_call.1} parent=55 // pred_check_branch
          %450 = sbr.rel (%p448) target = $region60
        $region59: #{tpu_custom_call.1} parent=55 // pred_region
          %451 = dma.done [#allocation7], 2048
        $region60: #{tpu_custom_call.1} parent=55 // pred_fallthru
          _
        // Predicated region
        $region61: #{tpu_custom_call.1} parent=55 // pred_check
          %p452 = pneg %p73
        $region62: #{tpu_custom_call.1} parent=55 // pred_check_branch
          %454 = sbr.rel (%p452) target = $region64
        $region63: #{tpu_custom_call.1} parent=55 // pred_region
          %455 = dma.done [#allocation10], 512
        $region64: #{tpu_custom_call.1} parent=55 // pred_fallthru
          _
        // Predicated region
        $region65: #{tpu_custom_call.1} parent=55 // pred_check
          %p456 = pneg %p115
        $region66: #{tpu_custom_call.1} parent=55 // pred_check_branch
          %458 = sbr.rel (%p456) target = $region68
        $region67: #{tpu_custom_call.1} parent=55 // pred_region
          %459 = dma.done [#allocation10], 2048
        $region68: #{tpu_custom_call.1} parent=55 // pred_fallthru
          _
        // Predicated region
        $region69: #{tpu_custom_call.1} parent=55 // pred_check
          %p460 = pneg %p136
        $region70: #{tpu_custom_call.1} parent=55 // pred_check_branch
          %462 = sbr.rel (%p460) target = $region72
        $region71: #{tpu_custom_call.1} parent=55 // pred_region
          %463 = dma.done [#allocation13], 2048
        $region72: #{tpu_custom_call.1} parent=55 // pred_fallthru
          _
        // Predicated region
        $region73: #{tpu_custom_call.1} parent=55 // pred_check
          %p464 = pneg %p157
        $region74: #{tpu_custom_call.1} parent=55 // pred_check_branch
          %466 = sbr.rel (%p464) target = $region76
        $region75: #{tpu_custom_call.1} parent=55 // pred_region
          %467 = dma.done [#allocation13], 2048
        $region76: #{tpu_custom_call.1} parent=55 // pred_fallthru
          _
        // Predicated region
        $region77: #{tpu_custom_call.1} parent=55 // pred_check
          %p468 = pneg %p199
        $region78: #{tpu_custom_call.1} parent=55 // pred_check_branch
          %470 = sbr.rel (%p468) target = $region80
        $region79: #{tpu_custom_call.1} parent=55 // pred_region
          %471 = dma.done [#allocation16], 2048
        $region80: #{tpu_custom_call.1} parent=55 // pred_fallthru
          _
        %p472 = pneg %p52
        %p473 = pneg %p49
        %p474 = pneg %p73
        %p475 = pneg %p70
        %p476 = pneg %p94
        %p477 = pneg %p91
        %p478 = pneg %p115
        %p479 = pneg %p112
        %p480 = pneg %p136
        %p481 = pneg %p133
        %p482 = pneg %p157
        %p483 = pneg %p154
        %p484 = pneg %p178
        %p485 = pneg %p175
        %p486 = pneg %p199
        %p487 = pneg %p196
        %p488 = pneg %p220
        %p489 = pneg %p217
        %p490 = pneg %p241
        %p491 = pneg %p238
        %p492 = pneg %p267
        %p493 = pneg %p264
        %s494 = sand.u32 %s36, 1
        %s495 = scalar_lea.sflag [#allocation19], %s494
        %s496 = sand.u32 %s254, 1
        %s497 = smul.addr %s496, 8
        %s498 = scalar_lea.vmem [#allocation18], %s497
        %p499 = pneg %p288
        %p500 = pneg %p285
        %p501 = pneg %p314
        %p502 = pneg %p311
        %s503 = sand.u32 %s36, 1
        %s504 = scalar_lea.sflag [#allocation22], %s503
        %s505 = sand.u32 %s301, 1
        %s506 = smul.addr %s505, 8
        %s507 = scalar_lea.vmem [#allocation21], %s506
        %p508 = pneg %p335
        %p509 = pneg %p332
        %p510 = scmp.eq.s32.totalorder %s36, 0
        // Predicated region
        $region81: #{tpu_custom_call.1} parent=55 // pred_check
          %p511 = pneg %p510
        $region82: #{tpu_custom_call.1} parent=55 // pred_check_branch
          %513 = sbr.rel (%p511) target = $region84
        $region83: #{tpu_custom_call.1} parent=55 // pred_region
          %v514 = vld [vmem:[#allocation6] sm:$0xff]
          %v515 = vld [vmem:[#allocation6 + $0x8] sm:$0xff]
          %v516 = vld [vmem:[#allocation6 + $0x10] sm:$0xff]
          %v517 = vld [vmem:[#allocation6 + $0x18] sm:$0xff]
          %v518 = vld [vmem:[#allocation6 + $0x20] sm:$0xff]
          %v519 = vld [vmem:[#allocation6 + $0x28] sm:$0xff]
          %v520 = vld [vmem:[#allocation6 + $0x30] sm:$0xff]
          %v521 = vld [vmem:[#allocation6 + $0x38] sm:$0xff]
          %v522 = vld [vmem:[#allocation6 + $0x40] sm:$0xff]
          %v523 = vld [vmem:[#allocation6 + $0x48] sm:$0xff]
          %v524 = vld [vmem:[#allocation6 + $0x50] sm:$0xff]
          %v525 = vld [vmem:[#allocation6 + $0x58] sm:$0xff]
          %v526 = vld [vmem:[#allocation6 + $0x60] sm:$0xff]
          %v527 = vld [vmem:[#allocation6 + $0x68] sm:$0xff]
          %v528 = vld [vmem:[#allocation6 + $0x70] sm:$0xff]
          %v529 = vld [vmem:[#allocation6 + $0x78] sm:$0xff]
          %vm530 = vcmask 261120
          %v531 = vsel %vm530, %v514, 0.0
          %v532 = vsel %vm530, %v515, 0.0
          %v533 = vadd.f32 %v531, %v532
          %v534 = vrot.slane %v533, 4
          %v535 = vadd.f32 %v533, %v534
          %v536 = vrot.slane %v535, 2
          %v537 = vadd.f32 %v535, %v536
          %v538 = vrot.slane %v537, 1
          %v539 = vadd.f32 %v537, %v538
          %v540 = vsel %vm530, %v516, 0.0
          %v541 = vsel %vm530, %v517, 0.0
          %v542 = vadd.f32 %v540, %v541
          %v543 = vrot.slane %v542, 4
          %v544 = vadd.f32 %v542, %v543
          %v545 = vrot.slane %v544, 2
          %v546 = vadd.f32 %v544, %v545
          %v547 = vrot.slane %v546, 1
          %v548 = vadd.f32 %v546, %v547
          %v549 = vsel %vm530, %v518, 0.0
          %v550 = vsel %vm530, %v519, 0.0
          %v551 = vadd.f32 %v549, %v550
          %v552 = vrot.slane %v551, 4
          %v553 = vadd.f32 %v551, %v552
          %v554 = vrot.slane %v553, 2
          %v555 = vadd.f32 %v553, %v554
          %v556 = vrot.slane %v555, 1
          %v557 = vadd.f32 %v555, %v556
          %v558 = vsel %vm530, %v520, 0.0
          %v559 = vsel %vm530, %v521, 0.0
          %v560 = vadd.f32 %v558, %v559
          %v561 = vrot.slane %v560, 4
          %v562 = vadd.f32 %v560, %v561
          %v563 = vrot.slane %v562, 2
          %v564 = vadd.f32 %v562, %v563
          %v565 = vrot.slane %v564, 1
          %v566 = vadd.f32 %v564, %v565
          %v567 = vsel %vm530, %v522, 0.0
          %v568 = vsel %vm530, %v523, 0.0
          %v569 = vadd.f32 %v567, %v568
          %v570 = vrot.slane %v569, 4
          %v571 = vadd.f32 %v569, %v570
          %v572 = vrot.slane %v571, 2
          %v573 = vadd.f32 %v571, %v572
          %v574 = vrot.slane %v573, 1
          %v575 = vadd.f32 %v573, %v574
          %v576 = vsel %vm530, %v524, 0.0
          %v577 = vsel %vm530, %v525, 0.0
          %v578 = vadd.f32 %v576, %v577
          %v579 = vrot.slane %v578, 4
          %v580 = vadd.f32 %v578, %v579
          %v581 = vrot.slane %v580, 2
          %v582 = vadd.f32 %v580, %v581
          %v583 = vrot.slane %v582, 1
          %v584 = vadd.f32 %v582, %v583
          %v585 = vsel %vm530, %v526, 0.0
          %v586 = vsel %vm530, %v527, 0.0
          %v587 = vadd.f32 %v585, %v586
          %v588 = vrot.slane %v587, 4
          %v589 = vadd.f32 %v587, %v588
          %v590 = vrot.slane %v589, 2
          %v591 = vadd.f32 %v589, %v590
          %v592 = vrot.slane %v591, 1
          %v593 = vadd.f32 %v591, %v592
          %v594 = vsel %vm530, %v528, 0.0
          %v595 = vsel %vm530, %v529, 0.0
          %v596 = vadd.f32 %v594, %v595
          %v597 = vrot.slane %v596, 4
          %v598 = vadd.f32 %v596, %v597
          %v599 = vrot.slane %v598, 2
          %v600 = vadd.f32 %v598, %v599
          %v601 = vrot.slane %v600, 1
          %v602 = vadd.f32 %v600, %v601
          %v603 = vrcp.pop 16.0
          %v604 = vmul.f32 %v539, %v603
          %v605 = vmul.f32 %v548, %v603
          %v606 = vmul.f32 %v557, %v603
          %v607 = vmul.f32 %v566, %v603
          %v608 = vmul.f32 %v575, %v603
          %v609 = vmul.f32 %v584, %v603
          %v610 = vmul.f32 %v593, %v603
          %v611 = vmul.f32 %v602, %v603
          %v612 = vld [vmem:[#allocation9] sm:$0xff]
          %v613 = vld [vmem:[#allocation9 + $0x8] sm:$0xff]
          %v614 = vld [vmem:[#allocation9 + $0x10] sm:$0xff]
          %v615 = vld [vmem:[#allocation9 + $0x18] sm:$0xff]
          %v616 = vld [vmem:[%s2] sm:$0x1]
          %v618 = vlaneseq
          %v619 = vshrl.u32 %v618, 7
          %v620 = vsub.s32 0, %v619
          %v621 = vrot.slane %v616, %v620
          %vm631 = vcmask 1041409
          %v632 = vsel %vm631, %v605, %v604
          %vm633 = vcmask 1042434
          %v634 = vsel %vm633, %v606, %v632
          %vm635 = vcmask 1043459
          %v636 = vsel %vm635, %v607, %v634
          %vm637 = vcmask 1044484
          %v638 = vsel %vm637, %v608, %v636
          %vm639 = vcmask 1045509
          %v640 = vsel %vm639, %v609, %v638
          %vm641 = vcmask 1046534
          %v642 = vsel %vm641, %v610, %v640
          %vm643 = vcmask 1047559
          %v644 = vsel %vm643, %v611, %v642
          %v645 = vsel %vm530, %v644, 0
          %647 = vmatprep.subr.mxu0 0.0
          %648 = vmatpush1.msra.mxu0 %v612
          %649 = vmatprep.subr.mxu0 0.0
          %650 = vmatpush1.msra.mxu0 %v613
          %651 = vmatprep.subr.mxu0 0.0
          %652 = vmatpush1.msra.mxu0 %v614
          %653 = vmatprep.subr.mxu0 0.0
          %654 = vmatpush1.msra.mxu0 %v615
          %655 = vmatprep.subr.mxu0 0.0
          %656 = vmatpush1.msra.mxu0 0.0
          %657 = vmatprep.subr.mxu0 0.0
          %658 = vmatpush1.msra.mxu0 0.0
          %659 = vmatprep.subr.mxu0 0.0
          %660 = vmatpush1.msra.mxu0 0.0
          %661 = vmatprep.subr.mxu0 0.0
          %662 = vmatpush1.msra.mxu0 0.0
          %663 = vmatprep.subr.mxu0 0.0
          %664 = vmatpush1.msra.mxu0 0.0
          %665 = vmatprep.subr.mxu0 0.0
          %666 = vmatpush1.msra.mxu0 0.0
          %667 = vmatprep.subr.mxu0 0.0
          %668 = vmatpush1.msra.mxu0 0.0
          %669 = vmatprep.subr.mxu0 0.0
          %670 = vmatpush1.msra.mxu0 0.0
          %671 = vmatprep.subr.mxu0 0.0
          %672 = vmatpush1.msra.mxu0 0.0
          %673 = vmatprep.subr.mxu0 0.0
          %674 = vmatpush1.msra.mxu0 0.0
          %675 = vmatprep.subr.mxu0 0.0
          %676 = vmatpush1.msra.mxu0 0.0
          %677 = vmatprep.subr.mxu0 0.0
          %678 = vmatpush1.msra.mxu0 0.0
          %679 = vmatprep.subr.mxu0 0.0
          %680 = vmatpush1.msra.mxu0 0.0
          %681 = vmatprep.subr.mxu0 0.0
          %682 = vmatpush1.msra.mxu0 0.0
          %683 = vmatprep.subr.mxu0 0.0
          %684 = vmatpush1.msra.mxu0 0.0
          %685 = vmatprep.subr.mxu0 0.0
          %686 = vmatpush1.msra.mxu0 0.0
          %687 = vmatprep.subr.mxu0 0.0
          %688 = vmatpush1.msra.mxu0 0.0
          %689 = vmatprep.subr.mxu0 0.0
          %690 = vmatpush1.msra.mxu0 0.0
          %691 = vmatprep.subr.mxu0 0.0
          %692 = vmatpush1.msra.mxu0 0.0
          %693 = vmatprep.subr.mxu0 0.0
          %694 = vmatpush1.msra.mxu0 0.0
          %695 = vmatprep.subr.mxu0 0.0
          %696 = vmatpush1.msra.mxu0 0.0
          %697 = vmatprep.subr.mxu0 0.0
          %698 = vmatpush1.msra.mxu0 0.0
          %699 = vmatprep.subr.mxu0 0.0
          %700 = vmatpush1.msra.mxu0 0.0
          %701 = vmatprep.subr.mxu0 0.0
          %702 = vmatpush1.msra.mxu0 0.0
          %703 = vmatprep.subr.mxu0 0.0
          %704 = vmatpush1.msra.mxu0 0.0
          %705 = vmatprep.subr.mxu0 0.0
          %706 = vmatpush1.msra.mxu0 0.0
          %707 = vmatprep.subr.mxu0 0.0
          %708 = vmatpush1.msra.mxu0 0.0
          %709 = vmatprep.subr.mxu0 0.0
          %710 = vmatpush1.msra.mxu0 0.0
          %711 = vmatprep.mubr.f32.mxu0 0.0
          %712 = vmatmul.mubr.f32.gmra.mrb[0].mxu0 %v645
          %v713 = vpop.f32.mrb[0].mxu0
          %v714 = vadd.f32 %v621, %v713
          %v715 = vpop.f32.mrb[0].mxu0
          %716 = vdwg.mxu0
          %v717 = vtanh.pop %v714
          %718 = vst [vmem:[#allocation23] sm:$0xff] %v717
          %v719 = vld [vmem:[#allocation14] sm:$0xff]
          %v720 = vld [vmem:[#allocation14 + $0x8] sm:$0xff]
          %v721 = vld [vmem:[#allocation14 + $0x10] sm:$0xff]
          %v722 = vld [vmem:[#allocation14 + $0x18] sm:$0xff]
          %v723 = vld [vmem:[#allocation14 + $0x20] sm:$0xff]
          %v724 = vld [vmem:[#allocation14 + $0x28] sm:$0xff]
          %v725 = vld [vmem:[#allocation14 + $0x30] sm:$0xff]
          %v726 = vld [vmem:[#allocation14 + $0x38] sm:$0xff]
          %v727 = vld [vmem:[#allocation14 + $0x40] sm:$0xff]
          %v728 = vld [vmem:[#allocation14 + $0x48] sm:$0xff]
          %v729 = vld [vmem:[#allocation14 + $0x50] sm:$0xff]
          %v730 = vld [vmem:[#allocation14 + $0x58] sm:$0xff]
          %v731 = vld [vmem:[#allocation14 + $0x60] sm:$0xff]
          %v732 = vld [vmem:[#allocation14 + $0x68] sm:$0xff]
          %v733 = vld [vmem:[#allocation14 + $0x70] sm:$0xff]
          %v734 = vld [vmem:[#allocation14 + $0x78] sm:$0xff]
          %v735 = vld [vmem:[%s6] sm:$0x1]
          %v737 = vlaneseq
          %v738 = vshrl.u32 %v737, 7
          %v739 = vsub.s32 0, %v738
          %v740 = vrot.slane %v735, %v739
          %742 = vmatprep.subr.mxu0 0.0
          %743 = vmatpush1.msra.mxu0 %v719
          %744 = vmatprep.subr.mxu0 0.0
          %745 = vmatpush1.msra.mxu0 %v720
          %746 = vmatprep.subr.mxu0 0.0
          %747 = vmatpush1.msra.mxu0 %v721
          %748 = vmatprep.subr.mxu0 0.0
          %749 = vmatpush1.msra.mxu0 %v722
          %750 = vmatprep.subr.mxu0 0.0
          %751 = vmatpush1.msra.mxu0 %v723
          %752 = vmatprep.subr.mxu0 0.0
          %753 = vmatpush1.msra.mxu0 %v724
          %754 = vmatprep.subr.mxu0 0.0
          %755 = vmatpush1.msra.mxu0 %v725
          %756 = vmatprep.subr.mxu0 0.0
          %757 = vmatpush1.msra.mxu0 %v726
          %758 = vmatprep.subr.mxu0 0.0
          %759 = vmatpush1.msra.mxu0 %v727
          %760 = vmatprep.subr.mxu0 0.0
          %761 = vmatpush1.msra.mxu0 %v728
          %762 = vmatprep.subr.mxu0 0.0
          %763 = vmatpush1.msra.mxu0 %v729
          %764 = vmatprep.subr.mxu0 0.0
          %765 = vmatpush1.msra.mxu0 %v730
          %766 = vmatprep.subr.mxu0 0.0
          %767 = vmatpush1.msra.mxu0 %v731
          %768 = vmatprep.subr.mxu0 0.0
          %769 = vmatpush1.msra.mxu0 %v732
          %770 = vmatprep.subr.mxu0 0.0
          %771 = vmatpush1.msra.mxu0 %v733
          %772 = vmatprep.subr.mxu0 0.0
          %773 = vmatpush1.msra.mxu0 %v734
          %774 = vmatprep.subr.mxu0 0.0
          %775 = vmatpush1.msra.mxu0 0.0
          %776 = vmatprep.subr.mxu0 0.0
          %777 = vmatpush1.msra.mxu0 0.0
          %778 = vmatprep.subr.mxu0 0.0
          %779 = vmatpush1.msra.mxu0 0.0
          %780 = vmatprep.subr.mxu0 0.0
          %781 = vmatpush1.msra.mxu0 0.0
          %782 = vmatprep.subr.mxu0 0.0
          %783 = vmatpush1.msra.mxu0 0.0
          %784 = vmatprep.subr.mxu0 0.0
          %785 = vmatpush1.msra.mxu0 0.0
          %786 = vmatprep.subr.mxu0 0.0
          %787 = vmatpush1.msra.mxu0 0.0
          %788 = vmatprep.subr.mxu0 0.0
          %789 = vmatpush1.msra.mxu0 0.0
          %790 = vmatprep.subr.mxu0 0.0
          %791 = vmatpush1.msra.mxu0 0.0
          %792 = vmatprep.subr.mxu0 0.0
          %793 = vmatpush1.msra.mxu0 0.0
          %794 = vmatprep.subr.mxu0 0.0
          %795 = vmatpush1.msra.mxu0 0.0
          %796 = vmatprep.subr.mxu0 0.0
          %797 = vmatpush1.msra.mxu0 0.0
          %798 = vmatprep.subr.mxu0 0.0
          %799 = vmatpush1.msra.mxu0 0.0
          %800 = vmatprep.subr.mxu0 0.0
          %801 = vmatpush1.msra.mxu0 0.0
          %802 = vmatprep.subr.mxu0 0.0
          %803 = vmatpush1.msra.mxu0 0.0
          %804 = vmatprep.subr.mxu0 0.0
          %805 = vmatpush1.msra.mxu0 0.0
          %806 = vmatprep.mubr.f32.mxu0 0.0
          %807 = vmatmul.mubr.f32.gmra.mrb[0].mxu0 %v717
          %v808 = vpop.f32.mrb[0].mxu0
          %v809 = vadd.f32 %v740, %v808
          %v810 = vpop.f32.mrb[0].mxu0
          %811 = vdwg.mxu0
          %812 = vst [vmem:[#allocation3] sm:$0xff] %v809
          %v813 = vld [vmem:[#allocation11] sm:$0xff]
          %v814 = vld [vmem:[#allocation11 + $0x8] sm:$0xff]
          %v815 = vld [vmem:[#allocation11 + $0x10] sm:$0xff]
          %v816 = vld [vmem:[#allocation11 + $0x18] sm:$0xff]
          %v817 = vld [vmem:[#allocation11 + $0x20] sm:$0xff]
          %v818 = vld [vmem:[#allocation11 + $0x28] sm:$0xff]
          %v819 = vld [vmem:[#allocation11 + $0x30] sm:$0xff]
          %v820 = vld [vmem:[#allocation11 + $0x38] sm:$0xff]
          %v821 = vld [vmem:[#allocation11 + $0x40] sm:$0xff]
          %v822 = vld [vmem:[#allocation11 + $0x48] sm:$0xff]
          %v823 = vld [vmem:[#allocation11 + $0x50] sm:$0xff]
          %v824 = vld [vmem:[#allocation11 + $0x58] sm:$0xff]
          %v825 = vld [vmem:[#allocation11 + $0x60] sm:$0xff]
          %v826 = vld [vmem:[#allocation11 + $0x68] sm:$0xff]
          %v827 = vld [vmem:[#allocation11 + $0x70] sm:$0xff]
          %v828 = vld [vmem:[#allocation11 + $0x78] sm:$0xff]
          %v829 = vld [vmem:[#allocation12] sm:$0xff]
          %v830 = vld [vmem:[#allocation12 + $0x8] sm:$0xff]
          %v831 = vld [vmem:[#allocation12 + $0x10] sm:$0xff]
          %v832 = vld [vmem:[#allocation12 + $0x18] sm:$0xff]
          %v833 = vld [vmem:[#allocation12 + $0x20] sm:$0xff]
          %v834 = vld [vmem:[#allocation12 + $0x28] sm:$0xff]
          %v835 = vld [vmem:[#allocation12 + $0x30] sm:$0xff]
          %v836 = vld [vmem:[#allocation12 + $0x38] sm:$0xff]
          %v837 = vld [vmem:[#allocation12 + $0x40] sm:$0xff]
          %v838 = vld [vmem:[#allocation12 + $0x48] sm:$0xff]
          %v839 = vld [vmem:[#allocation12 + $0x50] sm:$0xff]
          %v840 = vld [vmem:[#allocation12 + $0x58] sm:$0xff]
          %v841 = vld [vmem:[#allocation12 + $0x60] sm:$0xff]
          %v842 = vld [vmem:[#allocation12 + $0x68] sm:$0xff]
          %v843 = vld [vmem:[#allocation12 + $0x70] sm:$0xff]
          %v844 = vld [vmem:[#allocation12 + $0x78] sm:$0xff]
          %845 = vmatprep.subr.mxu0 0.0
          %846 = vmatpush1.msra.mxu0 %v829
          %847 = vmatprep.subr.mxu0 0.0
          %848 = vmatpush1.msra.mxu0 %v830
          %849 = vmatprep.subr.mxu0 0.0
          %850 = vmatpush1.msra.mxu0 %v831
          %851 = vmatprep.subr.mxu0 0.0
          %852 = vmatpush1.msra.mxu0 %v832
          %853 = vmatprep.subr.mxu0 0.0
          %854 = vmatpush1.msra.mxu0 %v833
          %855 = vmatprep.subr.mxu0 0.0
          %856 = vmatpush1.msra.mxu0 %v834
          %857 = vmatprep.subr.mxu0 0.0
          %858 = vmatpush1.msra.mxu0 %v835
          %859 = vmatprep.subr.mxu0 0.0
          %860 = vmatpush1.msra.mxu0 %v836
          %861 = vmatprep.subr.mxu0 0.0
          %862 = vmatpush1.msra.mxu0 %v837
          %863 = vmatprep.subr.mxu0 0.0
          %864 = vmatpush1.msra.mxu0 %v838
          %865 = vmatprep.subr.mxu0 0.0
          %866 = vmatpush1.msra.mxu0 %v839
          %867 = vmatprep.subr.mxu0 0.0
          %868 = vmatpush1.msra.mxu0 %v840
          %869 = vmatprep.subr.mxu0 0.0
          %870 = vmatpush1.msra.mxu0 %v841
          %871 = vmatprep.subr.mxu0 0.0
          %872 = vmatpush1.msra.mxu0 %v842
          %873 = vmatprep.subr.mxu0 0.0
          %874 = vmatpush1.msra.mxu0 %v843
          %875 = vmatprep.subr.mxu0 0.0
          %876 = vmatpush1.msra.mxu0 %v844
          %877 = vmatprep.subr.mxu0 0.0
          %878 = vmatpush1.msra.mxu0 0.0
          %879 = vmatprep.subr.mxu0 0.0
          %880 = vmatpush1.msra.mxu0 0.0
          %881 = vmatprep.subr.mxu0 0.0
          %882 = vmatpush1.msra.mxu0 0.0
          %883 = vmatprep.subr.mxu0 0.0
          %884 = vmatpush1.msra.mxu0 0.0
          %885 = vmatprep.subr.mxu0 0.0
          %886 = vmatpush1.msra.mxu0 0.0
          %887 = vmatprep.subr.mxu0 0.0
          %888 = vmatpush1.msra.mxu0 0.0
          %889 = vmatprep.subr.mxu0 0.0
          %890 = vmatpush1.msra.mxu0 0.0
          %891 = vmatprep.subr.mxu0 0.0
          %892 = vmatpush1.msra.mxu0 0.0
          %893 = vmatprep.subr.mxu0 0.0
          %894 = vmatpush1.msra.mxu0 0.0
          %895 = vmatprep.subr.mxu0 0.0
          %896 = vmatpush1.msra.mxu0 0.0
          %897 = vmatprep.subr.mxu0 0.0
          %898 = vmatpush1.msra.mxu0 0.0
          %899 = vmatprep.subr.mxu0 0.0
          %900 = vmatpush1.msra.mxu0 0.0
          %901 = vmatprep.subr.mxu0 0.0
          %902 = vmatpush1.msra.mxu0 0.0
          %903 = vmatprep.subr.mxu0 0.0
          %904 = vmatpush1.msra.mxu0 0.0
          %905 = vmatprep.subr.mxu0 0.0
          %906 = vmatpush1.msra.mxu0 0.0
          %907 = vmatprep.subr.mxu0 0.0
          %908 = vmatpush1.msra.mxu0 0.0
          %909 = vmatprep.mubr.f32.mxu0 0.0
          %910 = vmatmul.mubr.f32.gmra.mrb[0].mxu0 %v813
          %v911 = vpop.f32.mrb[0].mxu0
          %v912 = vadd.f32 0.0, %v911
          %v913 = vpop.f32.mrb[0].mxu0
          %914 = vmatprep.mubr.f32.mxu0 0.0
          %915 = vmatmul.mubr.f32.gmra.mrb[0].mxu0 %v814
          %v916 = vpop.f32.mrb[0].mxu0
          %v917 = vadd.f32 0.0, %v916
          %v918 = vpop.f32.mrb[0].mxu0
          %919 = vmatprep.mubr.f32.mxu0 0.0
          %920 = vmatmul.mubr.f32.gmra.mrb[0].mxu0 %v815
          %v921 = vpop.f32.mrb[0].mxu0
          %v922 = vadd.f32 0.0, %v921
          %v923 = vpop.f32.mrb[0].mxu0
          %924 = vmatprep.mubr.f32.mxu0 0.0
          %925 = vmatmul.mubr.f32.gmra.mrb[0].mxu0 %v816
          %v926 = vpop.f32.mrb[0].mxu0
          %v927 = vadd.f32 0.0, %v926
          %v928 = vpop.f32.mrb[0].mxu0
          %929 = vmatprep.mubr.f32.mxu0 0.0
          %930 = vmatmul.mubr.f32.gmra.mrb[0].mxu0 %v817
          %v931 = vpop.f32.mrb[0].mxu0
          %v932 = vadd.f32 0.0, %v931
          %v933 = vpop.f32.mrb[0].mxu0
          %934 = vmatprep.mubr.f32.mxu0 0.0
          %935 = vmatmul.mubr.f32.gmra.mrb[0].mxu0 %v818
          %v936 = vpop.f32.mrb[0].mxu0
          %v937 = vadd.f32 0.0, %v936
          %v938 = vpop.f32.mrb[0].mxu0
          %939 = vmatprep.mubr.f32.mxu0 0.0
          %940 = vmatmul.mubr.f32.gmra.mrb[0].mxu0 %v819
          %v941 = vpop.f32.mrb[0].mxu0
          %v942 = vadd.f32 0.0, %v941
          %v943 = vpop.f32.mrb[0].mxu0
          %944 = vmatprep.mubr.f32.mxu0 0.0
          %945 = vmatmul.mubr.f32.gmra.mrb[0].mxu0 %v820
          %v946 = vpop.f32.mrb[0].mxu0
          %v947 = vadd.f32 0.0, %v946
          %v948 = vpop.f32.mrb[0].mxu0
          %949 = vmatprep.mubr.f32.mxu0 0.0
          %950 = vmatmul.mubr.f32.gmra.mrb[0].mxu0 %v821
          %v951 = vpop.f32.mrb[0].mxu0
          %v952 = vadd.f32 0.0, %v951
          %v953 = vpop.f32.mrb[0].mxu0
          %954 = vmatprep.mubr.f32.mxu0 0.0
          %955 = vmatmul.mubr.f32.gmra.mrb[0].mxu0 %v822
          %v956 = vpop.f32.mrb[0].mxu0
          %v957 = vadd.f32 0.0, %v956
          %v958 = vpop.f32.mrb[0].mxu0
          %959 = vmatprep.mubr.f32.mxu0 0.0
          %960 = vmatmul.mubr.f32.gmra.mrb[0].mxu0 %v823
          %v961 = vpop.f32.mrb[0].mxu0
          %v962 = vadd.f32 0.0, %v961
          %v963 = vpop.f32.mrb[0].mxu0
          %964 = vmatprep.mubr.f32.mxu0 0.0
          %965 = vmatmul.mubr.f32.gmra.mrb[0].mxu0 %v824
          %v966 = vpop.f32.mrb[0].mxu0
          %v967 = vadd.f32 0.0, %v966
          %v968 = vpop.f32.mrb[0].mxu0
          %969 = vmatprep.mubr.f32.mxu0 0.0
          %970 = vmatmul.mubr.f32.gmra.mrb[0].mxu0 %v825
          %v971 = vpop.f32.mrb[0].mxu0
          %v972 = vadd.f32 0.0, %v971
          %v973 = vpop.f32.mrb[0].mxu0
          %974 = vmatprep.mubr.f32.mxu0 0.0
          %975 = vmatmul.mubr.f32.gmra.mrb[0].mxu0 %v826
          %v976 = vpop.f32.mrb[0].mxu0
          %v977 = vadd.f32 0.0, %v976
          %v978 = vpop.f32.mrb[0].mxu0
          %979 = vmatprep.mubr.f32.mxu0 0.0
          %980 = vmatmul.mubr.f32.gmra.mrb[0].mxu0 %v827
          %v981 = vpop.f32.mrb[0].mxu0
          %v982 = vadd.f32 0.0, %v981
          %v983 = vpop.f32.mrb[0].mxu0
          %984 = vmatprep.mubr.f32.mxu0 0.0
          %985 = vmatmul.mubr.f32.gmra.mrb[0].mxu0 %v828
          %v986 = vpop.f32.mrb[0].mxu0
          %v987 = vadd.f32 0.0, %v986
          %v988 = vpop.f32.mrb[0].mxu0
          %989 = vdwg.mxu0
          %990 = vst [vmem:[#allocation2] sm:$0xff] %v912
          %991 = vst [vmem:[#allocation2 + $0x8] sm:$0xff] %v917
          %992 = vst [vmem:[#allocation2 + $0x10] sm:$0xff] %v922
          %993 = vst [vmem:[#allocation2 + $0x18] sm:$0xff] %v927
          %994 = vst [vmem:[#allocation2 + $0x20] sm:$0xff] %v932
          %995 = vst [vmem:[#allocation2 + $0x28] sm:$0xff] %v937
          %996 = vst [vmem:[#allocation2 + $0x30] sm:$0xff] %v942
          %997 = vst [vmem:[#allocation2 + $0x38] sm:$0xff] %v947
          %998 = vst [vmem:[#allocation2 + $0x40] sm:$0xff] %v952
          %999 = vst [vmem:[#allocation2 + $0x48] sm:$0xff] %v957
          %1000 = vst [vmem:[#allocation2 + $0x50] sm:$0xff] %v962
          %1001 = vst [vmem:[#allocation2 + $0x58] sm:$0xff] %v967
          %1002 = vst [vmem:[#allocation2 + $0x60] sm:$0xff] %v972
          %1003 = vst [vmem:[#allocation2 + $0x68] sm:$0xff] %v977
          %1004 = vst [vmem:[#allocation2 + $0x70] sm:$0xff] %v982
          %1005 = vst [vmem:[#allocation2 + $0x78] sm:$0xff] %v987
          %vm1006 = vcmask 7168
          %1007 = vst.msk [vmem:[#allocation4] sm:$0xff] %vm1006, 1
          %1008 = vst.msk [vmem:[#allocation5] sm:$0xff] %vm1006, 1
          %vm1009 = vcmask 64512
          %1010 = vst.msk [vmem:[#allocation17] sm:$0xff] %vm1009, 2
          %1011 = vst.msk [vmem:[#allocation20] sm:$0xff] %vm1009, 0.0
        $region84: #{tpu_custom_call.1} parent=55 // pred_fallthru
          _
        %v1012 = vld [vmem:[#allocation4] sm:$0xff]
        %v1013 = vlaneseq
        %v1014 = vand.u32 %v1013, 127
        %1015 = vset.pattern.permute.xlu0 0
        %1016 = vperm.xlu0 %1015, %v1012
        %v1017 = vpop.permute.xlu0 %1016
        %vm1018 = vcmp.eq.s32.totalorder %v1014, %v1017
        %v1019 = vsel %vm1018, 1, 0
        %v1020 = vcvt.s32.f32 %v1019
        %v1021 = vld [vmem:[#allocation2] sm:$0xff]
        %v1022 = vld [vmem:[#allocation2 + $0x8] sm:$0xff]
        %v1023 = vld [vmem:[#allocation2 + $0x10] sm:$0xff]
        %v1024 = vld [vmem:[#allocation2 + $0x18] sm:$0xff]
        %v1025 = vld [vmem:[#allocation2 + $0x20] sm:$0xff]
        %v1026 = vld [vmem:[#allocation2 + $0x28] sm:$0xff]
        %v1027 = vld [vmem:[#allocation2 + $0x30] sm:$0xff]
        %v1028 = vld [vmem:[#allocation2 + $0x38] sm:$0xff]
        %v1029 = vld [vmem:[#allocation2 + $0x40] sm:$0xff]
        %v1030 = vld [vmem:[#allocation2 + $0x48] sm:$0xff]
        %v1031 = vld [vmem:[#allocation2 + $0x50] sm:$0xff]
        %v1032 = vld [vmem:[#allocation2 + $0x58] sm:$0xff]
        %v1033 = vld [vmem:[#allocation2 + $0x60] sm:$0xff]
        %v1034 = vld [vmem:[#allocation2 + $0x68] sm:$0xff]
        %v1035 = vld [vmem:[#allocation2 + $0x70] sm:$0xff]
        %v1036 = vld [vmem:[#allocation2 + $0x78] sm:$0xff]
        %v1037 = vld [vmem:[#allocation3] sm:$0xff]
        %1038 = vmatprep.subr.mxu0 0.0
        %1039 = vmatpush1.msra.mxu0 %v1021
        %1040 = vmatprep.subr.mxu0 0.0
        %1041 = vmatpush1.msra.mxu0 %v1022
        %1042 = vmatprep.subr.mxu0 0.0
        %1043 = vmatpush1.msra.mxu0 %v1023
        %1044 = vmatprep.subr.mxu0 0.0
        %1045 = vmatpush1.msra.mxu0 %v1024
        %1046 = vmatprep.subr.mxu0 0.0
        %1047 = vmatpush1.msra.mxu0 %v1025
        %1048 = vmatprep.subr.mxu0 0.0
        %1049 = vmatpush1.msra.mxu0 %v1026
        %1050 = vmatprep.subr.mxu0 0.0
        %1051 = vmatpush1.msra.mxu0 %v1027
        %1052 = vmatprep.subr.mxu0 0.0
        %1053 = vmatpush1.msra.mxu0 %v1028
        %1054 = vmatprep.subr.mxu0 0.0
        %1055 = vmatpush1.msra.mxu0 %v1029
        %1056 = vmatprep.subr.mxu0 0.0
        %1057 = vmatpush1.msra.mxu0 %v1030
        %1058 = vmatprep.subr.mxu0 0.0
        %1059 = vmatpush1.msra.mxu0 %v1031
        %1060 = vmatprep.subr.mxu0 0.0
        %1061 = vmatpush1.msra.mxu0 %v1032
        %1062 = vmatprep.subr.mxu0 0.0
        %1063 = vmatpush1.msra.mxu0 %v1033
        %1064 = vmatprep.subr.mxu0 0.0
        %1065 = vmatpush1.msra.mxu0 %v1034
        %1066 = vmatprep.subr.mxu0 0.0
        %1067 = vmatpush1.msra.mxu0 %v1035
        %1068 = vmatprep.subr.mxu0 0.0
        %1069 = vmatpush1.msra.mxu0 %v1036
        %1070 = vmatprep.subr.mxu0 0.0
        %1071 = vmatpush1.msra.mxu0 0.0
        %1072 = vmatprep.subr.mxu0 0.0
        %1073 = vmatpush1.msra.mxu0 0.0
        %1074 = vmatprep.subr.mxu0 0.0
        %1075 = vmatpush1.msra.mxu0 0.0
        %1076 = vmatprep.subr.mxu0 0.0
        %1077 = vmatpush1.msra.mxu0 0.0
        %1078 = vmatprep.subr.mxu0 0.0
        %1079 = vmatpush1.msra.mxu0 0.0
        %1080 = vmatprep.subr.mxu0 0.0
        %1081 = vmatpush1.msra.mxu0 0.0
        %1082 = vmatprep.subr.mxu0 0.0
        %1083 = vmatpush1.msra.mxu0 0.0
        %1084 = vmatprep.subr.mxu0 0.0
        %1085 = vmatpush1.msra.mxu0 0.0
        %1086 = vmatprep.subr.mxu0 0.0
        %1087 = vmatpush1.msra.mxu0 0.0
        %1088 = vmatprep.subr.mxu0 0.0
        %1089 = vmatpush1.msra.mxu0 0.0
        %1090 = vmatprep.subr.mxu0 0.0
        %1091 = vmatpush1.msra.mxu0 0.0
        %1092 = vmatprep.subr.mxu0 0.0
        %1093 = vmatpush1.msra.mxu0 0.0
        %1094 = vmatprep.subr.mxu0 0.0
        %1095 = vmatpush1.msra.mxu0 0.0
        %1096 = vmatprep.subr.mxu0 0.0
        %1097 = vmatpush1.msra.mxu0 0.0
        %1098 = vmatprep.subr.mxu0 0.0
        %1099 = vmatpush1.msra.mxu0 0.0
        %1100 = vmatprep.subr.mxu0 0.0
        %1101 = vmatpush1.msra.mxu0 0.0
        %1102 = vmatprep.mubr.f32.mxu0 0.0
        %1103 = vmatmul.mubr.f32.gmra.mrb[0].mxu0 %v1020
        %v1104 = vpop.f32.mrb[0].mxu0
        %v1105 = vadd.f32 %v1037, %v1104
        %v1106 = vpop.f32.mrb[0].mxu0
        %1107 = vdwg.mxu0
        %v1108 = vtanh.pop %v1105
        %v1109 = vld [vmem:[#allocation15] sm:$0xff]
        %v1110 = vld [vmem:[#allocation15 + $0x8] sm:$0xff]
        %v1111 = vld [vmem:[#allocation15 + $0x10] sm:$0xff]
        %v1112 = vld [vmem:[#allocation15 + $0x18] sm:$0xff]
        %v1113 = vld [vmem:[#allocation15 + $0x20] sm:$0xff]
        %v1114 = vld [vmem:[#allocation15 + $0x28] sm:$0xff]
        %v1115 = vld [vmem:[#allocation15 + $0x30] sm:$0xff]
        %v1116 = vld [vmem:[#allocation15 + $0x38] sm:$0xff]
        %v1117 = vld [vmem:[#allocation15 + $0x40] sm:$0xff]
        %v1118 = vld [vmem:[#allocation15 + $0x48] sm:$0xff]
        %v1119 = vld [vmem:[#allocation15 + $0x50] sm:$0xff]
        %v1120 = vld [vmem:[#allocation15 + $0x58] sm:$0xff]
        %v1121 = vld [vmem:[#allocation15 + $0x60] sm:$0xff]
        %v1122 = vld [vmem:[#allocation15 + $0x68] sm:$0xff]
        %v1123 = vld [vmem:[#allocation15 + $0x70] sm:$0xff]
        %v1124 = vld [vmem:[#allocation15 + $0x78] sm:$0xff]
        %v1125 = vld [vmem:[%s8] sm:$0x1]
        %v1127 = vlaneseq
        %v1128 = vshrl.u32 %v1127, 7
        %v1129 = vsub.s32 0, %v1128
        %v1130 = vrot.slane %v1125, %v1129
        %1132 = vmatprep.subr.mxu0 0.0
        %1133 = vmatpush1.msra.mxu0 %v1109
        %1134 = vmatprep.subr.mxu0 0.0
        %1135 = vmatpush1.msra.mxu0 %v1110
        %1136 = vmatprep.subr.mxu0 0.0
        %1137 = vmatpush1.msra.mxu0 %v1111
        %1138 = vmatprep.subr.mxu0 0.0
        %1139 = vmatpush1.msra.mxu0 %v1112
        %1140 = vmatprep.subr.mxu0 0.0
        %1141 = vmatpush1.msra.mxu0 %v1113
        %1142 = vmatprep.subr.mxu0 0.0
        %1143 = vmatpush1.msra.mxu0 %v1114
        %1144 = vmatprep.subr.mxu0 0.0
        %1145 = vmatpush1.msra.mxu0 %v1115
        %1146 = vmatprep.subr.mxu0 0.0
        %1147 = vmatpush1.msra.mxu0 %v1116
        %1148 = vmatprep.subr.mxu0 0.0
        %1149 = vmatpush1.msra.mxu0 %v1117
        %1150 = vmatprep.subr.mxu0 0.0
        %1151 = vmatpush1.msra.mxu0 %v1118
        %1152 = vmatprep.subr.mxu0 0.0
        %1153 = vmatpush1.msra.mxu0 %v1119
        %1154 = vmatprep.subr.mxu0 0.0
        %1155 = vmatpush1.msra.mxu0 %v1120
        %1156 = vmatprep.subr.mxu0 0.0
        %1157 = vmatpush1.msra.mxu0 %v1121
        %1158 = vmatprep.subr.mxu0 0.0
        %1159 = vmatpush1.msra.mxu0 %v1122
        %1160 = vmatprep.subr.mxu0 0.0
        %1161 = vmatpush1.msra.mxu0 %v1123
        %1162 = vmatprep.subr.mxu0 0.0
        %1163 = vmatpush1.msra.mxu0 %v1124
        %1164 = vmatprep.subr.mxu0 0.0
        %1165 = vmatpush1.msra.mxu0 0.0
        %1166 = vmatprep.subr.mxu0 0.0
        %1167 = vmatpush1.msra.mxu0 0.0
        %1168 = vmatprep.subr.mxu0 0.0
        %1169 = vmatpush1.msra.mxu0 0.0
        %1170 = vmatprep.subr.mxu0 0.0
        %1171 = vmatpush1.msra.mxu0 0.0
        %1172 = vmatprep.subr.mxu0 0.0
        %1173 = vmatpush1.msra.mxu0 0.0
        %1174 = vmatprep.subr.mxu0 0.0
        %1175 = vmatpush1.msra.mxu0 0.0
        %1176 = vmatprep.subr.mxu0 0.0
        %1177 = vmatpush1.msra.mxu0 0.0
        %1178 = vmatprep.subr.mxu0 0.0
        %1179 = vmatpush1.msra.mxu0 0.0
        %1180 = vmatprep.subr.mxu0 0.0
        %1181 = vmatpush1.msra.mxu0 0.0
        %1182 = vmatprep.subr.mxu0 0.0
        %1183 = vmatpush1.msra.mxu0 0.0
        %1184 = vmatprep.subr.mxu0 0.0
        %1185 = vmatpush1.msra.mxu0 0.0
        %1186 = vmatprep.subr.mxu0 0.0
        %1187 = vmatpush1.msra.mxu0 0.0
        %1188 = vmatprep.subr.mxu0 0.0
        %1189 = vmatpush1.msra.mxu0 0.0
        %1190 = vmatprep.subr.mxu0 0.0
        %1191 = vmatpush1.msra.mxu0 0.0
        %1192 = vmatprep.subr.mxu0 0.0
        %1193 = vmatpush1.msra.mxu0 0.0
        %1194 = vmatprep.subr.mxu0 0.0
        %1195 = vmatpush1.msra.mxu0 0.0
        %1196 = vmatprep.mubr.f32.mxu0 0.0
        %1197 = vmatmul.mubr.f32.gmra.mrb[0].mxu0 %v1108
        %v1198 = vpop.f32.mrb[0].mxu0
        %v1199 = vadd.f32 %v1130, %v1198
        %v1200 = vpop.f32.mrb[0].mxu0
        %1201 = vdwg.mxu0
        %1202 = vmax.xlane.f32.xlu0 %v1199
        %v1203 = vpop.xlane.xlu0 %1202
        %v1204 = vsub.f32 %v1199, %v1203
        %v1205 = vmul.f32 %v1204, 1.442695
        %v1206 = vpow.pop %v1205
        %1207 = vadd.xlane.f32.xlu0 %v1206
        %v1208 = vpop.xlane.xlu0 %1207
        %v1209 = vlog2.pop %v1208
        %v1210 = vmul.f32 %v1209, 0.6931472
        %v1211 = vsub.f32 0.0, %v1210
        %vm1212 = vcmp.eq.f32.partialorder %v1199, %v1203
        %v1213 = vsel %vm1212, %v1014, 128
        %v1214 = vand.u32 %v1213, 65535
        %v1215 = vshra.s32 %v1213, 16
        %v1216 = vcvt.s32.f32 %v1214
        %v1217 = vcvt.s32.f32 %v1215
        %1218 = vmin.xlane.f32.xlu0 %v1217
        %v1219 = vpop.xlane.xlu0 %1218
        %vm1220 = vcmp.eq.f32.partialorder %v1217, %v1219
        %v1221 = vsel %vm1220, %v1216, inf
        %1222 = vmin.xlane.f32.xlu0 %v1221
        %v1223 = vpop.xlane.xlu0 %1222
        %v1224 = vcvt.f32.s32 %v1223
        %v1225 = vcvt.f32.s32 %v1219
        %v1226 = vshll.u32 %v1225, 16
        %v1227 = vadd.s32 %v1226, %v1224
        %v1228 = vld [vmem:[#allocation5] sm:$0xff]
        %vm1229 = vcmp.ne.s32.totalorder %v1227, 2
        %v1230 = vsel %vm1229, 1, 0
        %v1231 = vmul.u32 %v1228, %v1230
        %vm1232 = vcmp.eq.s32.totalorder %v1231, 1
        %v1233 = vsel %vm1232, %v1227, 2
        %vm1234 = vcmask 7168
        %1235 = vst.msk [vmem:[#allocation5] sm:$0xff] %vm1234, %v1231
        %1236 = vst.msk [vmem:[#allocation4] sm:$0xff] %vm1234, %v1233
        %1237 = vst [vmem:[%s498] sm:$0xff] %v1199
        %1238 = vst [vmem:[%s507] sm:$0xff] %v1108
        %v1239 = vstv %s36
        %vm1240 = vcmp.eq.s32.totalorder %v1014, %v1239
        %v1241 = vld [vmem:[#allocation17] sm:$0xff]
        %1242 = vset.pattern.permute.xlu0 0
        %1243 = vperm.xlu0 %1242, %v1233
        %v1244 = vpop.permute.xlu0 %1243
        %v1245 = vsel %vm1240, %v1244, %v1241
        %vm1246 = vcmask 64512
        %1247 = vst.msk [vmem:[#allocation17] sm:$0xff] %vm1246, %v1245
        %v1248 = vld [vmem:[#allocation20] sm:$0xff]
        %v1249 = vsel %vm1240, %v1211, %v1248
        %1250 = vst.msk [vmem:[#allocation20] sm:$0xff] %vm1246, %v1249
        %s1251 = sand.u32 %s36, 1
        %s1252 = scalar_lea.sflag [#allocation19], %s1251
        %s1253 = sand.u32 %s254, 1
        %s1254 = smul.addr %s1253, 8
        %s1255 = scalar_lea.vmem [#allocation18], %s1254
        %s1256 = sand.u32 %s36, 1
        %s1257 = scalar_lea.sflag [#allocation22], %s1256
        %s1258 = sand.u32 %s301, 1
        %s1259 = smul.addr %s1258, 8
        %s1260 = scalar_lea.vmem [#allocation21], %s1259
        // Predicated region
        $region85: #{tpu_custom_call.1} parent=55 // pred_check
          %p1261 = pneg %p238
        $region86: #{tpu_custom_call.1} parent=55 // pred_check_branch
          %1263 = sbr.rel (%p1261) target = $region88
        $region87: #{tpu_custom_call.1} parent=55 // pred_region
          %s1265 = ssub.s32 128, 128
          %1266 = vsyncadd [#allocation8], %s1265
          %s1268 = sshll.u32 [#allocation17], 4
          %s1269 = int_to_ptr.vmem [resolvable:$true] %s1268
          %1271 = dma.vmem_to_hbm [thread:$0]  %s1269, 128, %s9, [#allocation8]
        $region88: #{tpu_custom_call.1} parent=55 // pred_fallthru
          _
        // Predicated region
        $region89: #{tpu_custom_call.1} parent=55 // pred_check
          %p1272 = pneg %p264
        $region90: #{tpu_custom_call.1} parent=55 // pred_check_branch
          %1274 = sbr.rel (%p1272) target = $region92
        $region91: #{tpu_custom_call.1} parent=55 // pred_region
          %s1276 = ssub.s32 128, 128
          %1277 = vsyncadd %s1252, %s1276
          %s1278 = smul.addr %s36, 128
          %s1279 = scalar_lea.hbm %s10, %s1278
          %s1281 = sshll.u32 %s1255, 4
          %s1282 = int_to_ptr.vmem [resolvable:$true] %s1281
          %1284 = dma.vmem_to_hbm [thread:$0]  %s1282, 128, %s1279, %s1252
        $region92: #{tpu_custom_call.1} parent=55 // pred_fallthru
          _
        // Predicated region
        $region93: #{tpu_custom_call.1} parent=55 // pred_check
          %p1285 = pneg %p285
        $region94: #{tpu_custom_call.1} parent=55 // pred_check_branch
          %1287 = sbr.rel (%p1285) target = $region96
        $region95: #{tpu_custom_call.1} parent=55 // pred_region
          %s1289 = ssub.s32 128, 128
          %1290 = vsyncadd [#allocation19], %s1289
          %s1292 = sshll.u32 [#allocation20], 4
          %s1293 = int_to_ptr.vmem [resolvable:$true] %s1292
          %1295 = dma.vmem_to_hbm [thread:$0]  %s1293, 128, %s11, [#allocation19]
        $region96: #{tpu_custom_call.1} parent=55 // pred_fallthru
          _
        // Predicated region
        $region97: #{tpu_custom_call.1} parent=55 // pred_check
          %p1296 = pneg %p311
        $region98: #{tpu_custom_call.1} parent=55 // pred_check_branch
          %1298 = sbr.rel (%p1296) target = $region100
        $region99: #{tpu_custom_call.1} parent=55 // pred_region
          %s1300 = ssub.s32 128, 128
          %1301 = vsyncadd %s1257, %s1300
          %s1302 = smul.addr %s36, 128
          %s1303 = scalar_lea.hbm %s12, %s1302
          %s1305 = sshll.u32 %s1260, 4
          %s1306 = int_to_ptr.vmem [resolvable:$true] %s1305
          %1308 = dma.vmem_to_hbm [thread:$0]  %s1306, 128, %s1303, %s1257
        $region100: #{tpu_custom_call.1} parent=55 // pred_fallthru
          _
        // Predicated region
        $region101: #{tpu_custom_call.1} parent=55 // pred_check
          %p1309 = pneg %p332
        $region102: #{tpu_custom_call.1} parent=55 // pred_check_branch
          %1311 = sbr.rel (%p1309) target = $region104
        $region103: #{tpu_custom_call.1} parent=55 // pred_region
          %s1313 = ssub.s32 128, 128
          %1314 = vsyncadd [#allocation22], %s1313
          %s1316 = sshll.u32 [#allocation23], 4
          %s1317 = int_to_ptr.vmem [resolvable:$true] %s1316
          %1319 = dma.vmem_to_hbm [thread:$0]  %s1317, 128, %s13, [#allocation22]
        $region104: #{tpu_custom_call.1} parent=55 // pred_fallthru
          _
        // Predicated region
        $region105: #{tpu_custom_call.1} parent=55 // pred_check
          %p1320 = pneg %p238
        $region106: #{tpu_custom_call.1} parent=55 // pred_check_branch
          %1322 = sbr.rel (%p1320) target = $region108
        $region107: #{tpu_custom_call.1} parent=55 // pred_region
          %1323 = dma.done [#allocation8], 128
        $region108: #{tpu_custom_call.1} parent=55 // pred_fallthru
          _
        // Predicated region
        $region109: #{tpu_custom_call.1} parent=55 // pred_check
          %p1324 = pneg %p285
        $region110: #{tpu_custom_call.1} parent=55 // pred_check_branch
          %1326 = sbr.rel (%p1324) target = $region112
        $region111: #{tpu_custom_call.1} parent=55 // pred_region
          %1327 = dma.done [#allocation19], 128
        $region112: #{tpu_custom_call.1} parent=55 // pred_fallthru
          _
        // Predicated region
        $region113: #{tpu_custom_call.1} parent=55 // pred_check
          %p1328 = pneg %p332
        $region114: #{tpu_custom_call.1} parent=55 // pred_check_branch
          %1330 = sbr.rel (%p1328) target = $region116
        $region115: #{tpu_custom_call.1} parent=55 // pred_region
          %1331 = dma.done [#allocation22], 128
        $region116: #{tpu_custom_call.1} parent=55 // pred_fallthru
          _
      $region56: #{tpu_custom_call.1} parent=5 // pred_fallthru
        _
      %p1332 = scmp.le.s32.totalorder 2, %s31
      // Predicated region
      $region117: #{tpu_custom_call.1} parent=5 // pred_check
        %p1333 = pneg %p1332
      $region118: #{tpu_custom_call.1} parent=5 // pred_check_branch
        %1335 = sbr.rel (%p1333) target = $region120
      $region119: #{tpu_custom_call.1} parent=5 // pred_region
        %s1336 = ssub.s32 %s31, 2
        // Predicated region
        $region121: #{tpu_custom_call.1} parent=119 // pred_check
          %p1337 = pneg %p270
        $region122: #{tpu_custom_call.1} parent=119 // pred_check_branch
          %1339 = sbr.rel (%p1337) target = $region124
        $region123: #{tpu_custom_call.1} parent=119 // pred_region
          %s1340 = sand.u32 %s37, 1
          %s1341 = scalar_lea.sflag [#allocation19], %s1340
          %s1342 = sand.u32 %s255, 1
          %s1343 = smul.addr %s1342, 8
          %s1344 = scalar_lea.vmem [#allocation18], %s1343
          %1345 = dma.done %s1341, 128
        $region124: #{tpu_custom_call.1} parent=119 // pred_fallthru
          _
        // Predicated region
        $region125: #{tpu_custom_call.1} parent=119 // pred_check
          %p1346 = pneg %p317
        $region126: #{tpu_custom_call.1} parent=119 // pred_check_branch
          %1348 = sbr.rel (%p1346) target = $region128
        $region127: #{tpu_custom_call.1} parent=119 // pred_region
          %s1349 = sand.u32 %s37, 1
          %s1350 = scalar_lea.sflag [#allocation22], %s1349
          %s1351 = sand.u32 %s302, 1
          %s1352 = smul.addr %s1351, 8
          %s1353 = scalar_lea.vmem [#allocation21], %s1352
          %1354 = dma.done %s1350, 128
        $region128: #{tpu_custom_call.1} parent=119 // pred_fallthru
          _
      $region120: #{tpu_custom_call.1} parent=5 // pred_fallthru
        _
    $region6: #{tpu_custom_call.1} parent=1 // loop_footer
      %s35 = sadd.s32 1, %s31
    $region7: #{tpu_custom_call.1} parent=1 // loop_footer_branch
      %30 = sbr.rel target = $region3
    $region8: #{tpu_custom_call.1} parent=1 // loop_exit
      _
    %1355 = vsyncpa [#allocation7], 1
    %s1356 = scalar_lea.sflag [#allocation7], 1
    %1357 = vsyncpa %s1356, 1
    %1358 = vsyncpa [#allocation10], 1
    %1359 = vsyncpa [#allocation13], 1
    %1360 = vsyncpa [#allocation16], 1
    %1361 = vsyncpa [#allocation8], 1
    %s1362 = scalar_lea.sflag [#allocation8], 1
    %1363 = vsyncpa %s1362, 1
    %1364 = vsyncpa [#allocation19], 1
    %s1365 = scalar_lea.sflag [#allocation19], 1
    %1366 = vsyncpa %s1365, 1
    %1367 = vsyncpa [#allocation22], 1
    %s1368 = scalar_lea.sflag [#allocation22], 1
    %1369 = vsyncpa %s1368, 1

</llo_original>
